<compile_context>
chip_gen: v7x
topology: tpu7x:2x2x1
jax: 0.10.0
libtpu: 0.0.40
codegen_flags: <defaults>
</compile_context>

<pallas_src>
import math
import functools

import jax
import jax.numpy as jnp
from jax.experimental import pallas as pl
from jax.experimental.pallas import tpu as pltpu

EPS = 1e-7          # module-level EPS from the PyTorch file
BALL_EPS = 1e-5     # Poincare-ball boundary epsilon for projx
LN_EPS = 1e-5       # nn.LayerNorm default eps


def _wubu_level_kernel(scalars_ref,                       # SMEM: [c, scale, flow_scale]
                       packed_ref, sig_ref,               # (TB, (2+R)*D) bf16, (TB, 1) f32
                       w1_ref, w1s_ref, b1_ref,           # packed W1 (bf16), sigma row, bias
                       g1_ref, be1_ref,                   # LayerNorm gamma/beta
                       w2_ref, b2_ref,
                       wf1_ref, bf1_ref, wf2_ref, bf2_ref,
                       xhyp_ref, vout_ref):
    f32 = jnp.float32
    bf16 = jnp.bfloat16
    dot = lambda a, b: jnp.dot(a, b, preferred_element_type=f32)

    c = scalars_ref[0]
    scale = scalars_ref[1]
    flow_scale = scalars_ref[2]

    # ---- tangent_combiner layer 1: one K=(2+R)*D bf16 matmul over the packed
    #      [v, ld, rel_1..rel_R] activation (relative-vector mean folded into
    #      the weight); sigma contributes a rank-1 VPU term. ----
    h = dot(packed_ref[...], w1_ref[...])
    h = h + sig_ref[...] * w1s_ref[...] + b1_ref[...]

    # LayerNorm over the hidden dim (f32).
    mu = jnp.mean(h, axis=-1, keepdims=True)
    d = h - mu
    var = jnp.mean(d * d, axis=-1, keepdims=True)
    h = d * jax.lax.rsqrt(var + LN_EPS) * g1_ref[...] + be1_ref[...]

    h = jax.nn.gelu(h, approximate=True)
    # (Dropout is identity at inference time.)

    v_comb = dot(h.astype(bf16), w2_ref[...]) + b2_ref[...]                  # (TB, D) f32

    # ---- tangent flow (MLP), additive: v + flow_scale * MLP(v) ----
    f = jax.nn.gelu(dot(v_comb.astype(bf16), wf1_ref[...]) + bf1_ref[...],
                    approximate=True)
    f = dot(f.astype(bf16), wf2_ref[...]) + bf2_ref[...]
    v_flowed = v_comb + f * flow_scale

    # ---- hyperbolic mapping: scale, expmap0, projx, (Identity), logmap0 ----
    # One cross-lane reduction; the other two row norms are analytic; all
    # rescalings are (TB,1) column ratios via EUP reciprocals.
    v_scaled = v_flowed * scale
    sqrt_c = jnp.sqrt(c)
    inv_sqrt_c = jax.lax.rsqrt(c)
    max_norm = (1.0 - BALL_EPS) * inv_sqrt_c

    vn = jnp.maximum(jnp.sqrt(jnp.sum(v_scaled * v_scaled, axis=-1, keepdims=True)), EPS)
    a = sqrt_c * vn
    tanh_a = jnp.tanh(a)
    x_hyp = v_scaled * (tanh_a * pl.reciprocal(a, approx=True))              # expmap0

    # ||x_hyp|| = tanh(a)/sqrt(c) analytically — no second reduction.
    xn = jnp.maximum(tanh_a * inv_sqrt_c, EPS)
    proj_fac = jnp.minimum(1.0, max_norm * pl.reciprocal(xn, approx=True))
    x_proj = x_hyp * proj_fac                                                # projx
    # (intra_ball_processor is Identity; a second projx is a no-op.)

    # ||x_proj|| = min(||x_hyp||, max_norm) analytically — no third reduction.
    yn = jnp.minimum(xn, max_norm)
    z = sqrt_c * yn
    atanh_z = 0.5 * jnp.log((1.0 + z) / (1.0 - z))
    ratio2 = atanh_z * pl.reciprocal(z, approx=True)                         # logmap0

    xhyp_ref[...] = x_proj
    vout_ref[...] = x_proj * (ratio2 / (scale + EPS))


@functools.partial(jax.jit, static_argnames=("block_b",))
def wubu_level_forward(params, v_tangent_in, relative_vectors_stacked,
                       ld_tangent_in, sigma_in, block_b=1024):
    """JAX/Pallas equivalent of WuBuNestingLevel.forward (inference mode).

    Returns (x_hyp_processed [B,D], v_tangent_out [B,D],
             ld_param_out [D], sigma_param_out [1]).
    """
    B, D = v_tangent_in.shape
    R = relative_vectors_stacked.shape[1]
    H1 = params["w1_v"].shape[1]
    Hf = params["wf1"].shape[1]
    Kp = (2 + R) * D

    # Constrained geometry scalars: softplus(unconstrained) + min  (get_constrained_params).
    c = jax.nn.softplus(params["unconstrained_curvature"]) + params["curvature_min"]
    s = jax.nn.softplus(params["unconstrained_scale"]) + params["scale_min"]
    spread = jax.nn.softplus(params["unconstrained_spread"]) + params["spread_min"]
    scalars = jnp.stack(
        [c, s, params["tangent_flow_scale"]]).astype(jnp.float32)    # SMEM payload

    # Pack [v, ld, rel_1..rel_R] along the feature axis (single fused XLA op);
    # the 'mean' relative-vector aggregation is folded into the packed weight.
    rel_flat = relative_vectors_stacked.reshape(B, R * D)
    packed = jnp.concatenate(
        [v_tangent_in, ld_tangent_in, rel_flat], axis=-1).astype(jnp.bfloat16)

    w1_packed = jnp.concatenate(
        [params["w1_v"], params["w1_ld"]] + [params["w1_rel"] / R] * R,
        axis=0).astype(jnp.bfloat16)                                 # (Kp, H1)
    w2 = params["w2"].astype(jnp.bfloat16)
    wf1 = params["wf1"].astype(jnp.bfloat16)
    wf2 = params["wf2"].astype(jnp.bfloat16)

    # Batch tile: as large as fits (step-overhead bound at these dims), but
    # guarantee >= 2 grid steps so both v7x TensorCores get work under
    # dimension_semantics=("parallel",).
    tb = min(block_b, B)
    if pl.cdiv(B, tb) == 1 and B >= 16:
        tb = ((((B + 1) // 2) + 7) // 8) * 8      # ~B/2, rounded up to multiple of 8
    grid = (pl.cdiv(B, tb),)

    row = lambda i: (i, 0)        # batch-tiled operands
    rep = lambda i: (0, 0)        # weights / biases, resident across the grid

    in_specs = [
        pl.BlockSpec(memory_space=pltpu.MemorySpace.SMEM),   # scalars
        pl.BlockSpec((tb, Kp), row),                         # packed [v, ld, rel...] (bf16)
        pl.BlockSpec((tb, 1), row),                          # sigma_in (f32)
        pl.BlockSpec((Kp, H1), rep),                         # packed W1 (bf16)
        pl.BlockSpec((1, H1), rep),                          # W1 (sigma row, f32)
        pl.BlockSpec((1, H1), rep),                          # b1
        pl.BlockSpec((1, H1), rep),                          # LN gamma
        pl.BlockSpec((1, H1), rep),                          # LN beta
        pl.BlockSpec((H1, D), rep),                          # W2 (bf16)
        pl.BlockSpec((1, D), rep),                           # b2
        pl.BlockSpec((D, Hf), rep),                          # flow W1 (bf16)
        pl.BlockSpec((1, Hf), rep),                          # flow b1
        pl.BlockSpec((Hf, D), rep),                          # flow W2 (bf16)
        pl.BlockSpec((1, D), rep),                           # flow b2
    ]
    out_specs = [pl.BlockSpec((tb, D), row), pl.BlockSpec((tb, D), row)]
    out_shape = [jax.ShapeDtypeStruct((B, D), jnp.float32),
                 jax.ShapeDtypeStruct((B, D), jnp.float32)]

    # Actual VMEM footprint at tb=1024 is ~2-3 MiB (double-buffered bf16 input
    # + f32 outputs + ~50 KB weights); 32 MiB limit is safe on v5e/v6e/v7x.
    x_hyp, v_tangent_out = pl.pallas_call(
        _wubu_level_kernel,
        grid=grid,
        in_specs=in_specs,
        out_specs=out_specs,
        out_shape=out_shape,
        compiler_params=pltpu.CompilerParams(
            dimension_semantics=("parallel",),        # megacore split on v7x
            vmem_limit_bytes=32 * 1024 * 1024),
    )(scalars,
      packed, sigma_in,
      w1_packed, params["w1_sig"], params["b1"],
      params["ln_gamma"], params["ln_beta"],
      w2, params["b2"],
      wf1, params["bf1"], wf2, params["bf2"])

    ld_param_out = params["level_descriptor"]
    sigma_param_out = jnp.reshape(spread, (1,))
    return x_hyp, v_tangent_out, ld_param_out, sigma_param_out


# ----------------------------- pure-JAX reference ----------------------------
def _reference_forward(params, v_in, rel_stacked, ld_in, sigma_in):
    hp = jax.lax.Precision.HIGHEST
    dot = lambda a, b: jnp.dot(a, b, precision=hp, preferred_element_type=jnp.float32)

    c = jax.nn.softplus(params["unconstrained_curvature"]) + params["curvature_min"]
    s = jax.nn.softplus(params["unconstrained_scale"]) + params["scale_min"]
    spread = jax.nn.softplus(params["unconstrained_spread"]) + params["spread_min"]

    rel_summary = jnp.mean(rel_stacked, axis=1)
    x = jnp.concatenate([v_in, rel_summary, ld_in, sigma_in], axis=-1)

    w1_full = jnp.concatenate(
        [params["w1_v"], params["w1_rel"], params["w1_ld"], params["w1_sig"]], axis=0)
    h = dot(x, w1_full) + params["b1"]
    mu = jnp.mean(h, -1, keepdims=True)
    var = jnp.mean((h - mu) ** 2, -1, keepdims=True)
    h = (h - mu) * jax.lax.rsqrt(var + LN_EPS) * params["ln_gamma"] + params["ln_beta"]
    h = jax.nn.gelu(h, approximate=True)
    v_comb = dot(h, params["w2"]) + params["b2"]

    f = jax.nn.gelu(dot(v_comb, params["wf1"]) + params["bf1"], approximate=True)
    f = dot(f, params["wf2"]) + params["bf2"]
    v_flowed = v_comb + f * params["tangent_flow_scale"]

    v_scaled = v_flowed * s
    sqrt_c = jnp.sqrt(c)
    vn = jnp.maximum(jnp.linalg.norm(v_scaled, axis=-1, keepdims=True), EPS)
    x_hyp = jnp.tanh(sqrt_c * vn) * v_scaled / (sqrt_c * vn)
    max_norm = (1.0 - BALL_EPS) / sqrt_c
    xn = jnp.maximum(jnp.linalg.norm(x_hyp, axis=-1, keepdims=True), EPS)
    x_proj = x_hyp * jnp.minimum(1.0, max_norm / xn)
    yn = jnp.clip(jnp.linalg.norm(x_proj, axis=-1, keepdims=True), EPS, max_norm)
    z = sqrt_c * yn
    v_out_scaled = 0.5 * jnp.log((1.0 + z) / (1.0 - z)) * x_proj / z
    v_out = v_out_scaled / (s + EPS)
    return x_proj, v_out, params["level_descriptor"], jnp.reshape(spread, (1,))


# ------------------------------- parameter init -------------------------------
def make_params(key, dim=32, flow_hidden_ratio=0.5,
                curvature_init=1.0, curvature_min=0.01,
                scale_init=0.25, scale_min=0.001,
                spread_init=0.5, spread_min=0.001,
                level_descriptor_init_scale=0.01,
                tangent_flow_scale=1.0):
    comb_in = 3 * dim + 1                       # v + rel + ld + sigma
    h1 = comb_in // 2                           # default combiner hidden dim
    hf = max(16, int(dim * flow_hidden_ratio))  # TangentFlow hidden dim
    ks = jax.random.split(key, 16)

    def xavier(k, shape):
        lim = math.sqrt(6.0 / (shape[0] + shape[1]))
        return jax.random.uniform(k, shape, jnp.float32, -lim, lim)

    rnd = lambda k, shape, scl: scl * jax.random.normal(k, shape, jnp.float32)
    return dict(
        # tangent_combiner first Linear: stored pre-transposed (in,out) and
        # pre-split along the virtual concat input axis (static preprocessing).
        w1_v=xavier(ks[0], (dim, h1)),
        w1_rel=xavier(ks[1], (dim, h1)),
        w1_ld=xavier(ks[2], (dim, h1)),
        w1_sig=xavier(ks[3], (1, h1)),
        b1=rnd(ks[4], (1, h1), 0.01),
        ln_gamma=jnp.ones((1, h1), jnp.float32) + rnd(ks[5], (1, h1), 0.05),
        ln_beta=rnd(ks[6], (1, h1), 0.02),
        w2=xavier(ks[7], (h1, dim)),
        b2=rnd(ks[8], (1, dim), 0.01),
        # TangentFlow MLP.
        wf1=xavier(ks[9], (dim, hf)),
        bf1=rnd(ks[10], (1, hf), 0.01),
        wf2=xavier(ks[11], (hf, dim)),
        bf2=rnd(ks[12], (1, dim), 0.01),
        level_descriptor=rnd(ks[13], (dim,), level_descriptor_init_scale),
        # Unconstrained geometry params, mirroring the module's init.
        unconstrained_curvature=jnp.float32(math.log(max(EPS, curvature_init - curvature_min))),
        unconstrained_scale=jnp.float32(math.log(max(EPS, scale_init - scale_min))),
        unconstrained_spread=jnp.float32(math.log(max(EPS, spread_init - spread_min))),
        curvature_min=jnp.float32(curvature_min),
        scale_min=jnp.float32(scale_min),
        spread_min=jnp.float32(spread_min),
        tangent_flow_scale=jnp.float32(tangent_flow_scale),
    )


if __name__ == "__main__":
    key = jax.random.PRNGKey(0)
    k_p, k_v, k_r, k_l, k_s = jax.random.split(key, 5)

    dim, B, R = 32, 16, 4                      # small shapes: batch=16, dim=32, 4 relative vectors
    params = make_params(k_p, dim=dim)

    v_in = jax.random.normal(k_v, (B, dim), jnp.float32)
    rel_stacked = jax.random.normal(k_r, (B, R, dim), jnp.float32)
    ld_in = 0.1 * jax.random.normal(k_l, (B, dim), jnp.float32)
    sigma_in = jax.nn.softplus(jax.random.normal(k_s, (B, 1), jnp.float32))

    x_hyp, v_out, ld_out, sigma_out = wubu_level_forward(
        params, v_in, rel_stacked, ld_in, sigma_in)
    jax.block_until_ready((x_hyp, v_out, ld_out, sigma_out))

    rx, rv, rld, rs = _reference_forward(params, v_in, rel_stacked, ld_in, sigma_in)

    assert x_hyp.shape == (B, dim) and v_out.shape == (B, dim)
    assert ld_out.shape == (dim,) and sigma_out.shape == (1,)
    assert bool(jnp.all(jnp.isfinite(x_hyp))) and bool(jnp.all(jnp.isfinite(v_out)))
    # bf16 matmul operands + EUP approx reciprocals vs f32 HIGHEST reference:
    # tolerance loosened from 1e-3 to 2.5e-2 accordingly.
    assert jnp.allclose(x_hyp, rx, atol=2.5e-2, rtol=2.5e-2)
    assert jnp.allclose(v_out, rv, atol=2.5e-2, rtol=2.5e-2)
    assert jnp.allclose(ld_out, rld) and jnp.allclose(sigma_out, rs)

    print("KERNEL_OK")
</pallas_src>

<mosaic_0001>
module attributes {stable_mosaic.version = 11 : i64} {
  func.func @_wubu_level_kernel(%arg0: i32, %arg1: memref<3xf32, #tpu.memory_space<smem>>, %arg2: memref<8x192xbf16, #tpu.memory_space<vmem>>, %arg3: memref<8x1xf32, #tpu.memory_space<vmem>>, %arg4: memref<192x48xbf16, #tpu.memory_space<vmem>>, %arg5: memref<1x48xf32, #tpu.memory_space<vmem>>, %arg6: memref<1x48xf32, #tpu.memory_space<vmem>>, %arg7: memref<1x48xf32, #tpu.memory_space<vmem>>, %arg8: memref<1x48xf32, #tpu.memory_space<vmem>>, %arg9: memref<48x32xbf16, #tpu.memory_space<vmem>>, %arg10: memref<1x32xf32, #tpu.memory_space<vmem>>, %arg11: memref<32x16xbf16, #tpu.memory_space<vmem>>, %arg12: memref<1x16xf32, #tpu.memory_space<vmem>>, %arg13: memref<16x32xbf16, #tpu.memory_space<vmem>>, %arg14: memref<1x32xf32, #tpu.memory_space<vmem>>, %arg15: memref<8x32xf32, #tpu.memory_space<vmem>>, %arg16: memref<8x32xf32, #tpu.memory_space<vmem>>) attributes {dimension_semantics = [#tpu.dimension_semantics<parallel>], iteration_bounds = array<i64: 2>, scalar_prefetch = 0 : i64, scratch_operands = 0 : i64, tpu.core_type = #tpu.core_type<tc>, window_params = [{transform_indices = @transform_0, window_bounds = array<i64: 3>}, {transform_indices = @transform_1, window_bounds = array<i64: 8, 192>}, {transform_indices = @transform_2, window_bounds = array<i64: 8, 1>}, {pipeline_mode = #tpu.pipeline_mode<synchronous>, transform_indices = @transform_3, window_bounds = array<i64: 192, 48>}, {pipeline_mode = #tpu.pipeline_mode<synchronous>, transform_indices = @transform_4, window_bounds = array<i64: 1, 48>}, {pipeline_mode = #tpu.pipeline_mode<synchronous>, transform_indices = @transform_5, window_bounds = array<i64: 1, 48>}, {pipeline_mode = #tpu.pipeline_mode<synchronous>, transform_indices = @transform_6, window_bounds = array<i64: 1, 48>}, {pipeline_mode = #tpu.pipeline_mode<synchronous>, transform_indices = @transform_7, window_bounds = array<i64: 1, 48>}, {pipeline_mode = #tpu.pipeline_mode<synchronous>, transform_indices = @transform_8, window_bounds = array<i64: 48, 32>}, {pipeline_mode = #tpu.pipeline_mode<synchronous>, transform_indices = @transform_9, window_bounds = array<i64: 1, 32>}, {pipeline_mode = #tpu.pipeline_mode<synchronous>, transform_indices = @transform_10, window_bounds = array<i64: 32, 16>}, {pipeline_mode = #tpu.pipeline_mode<synchronous>, transform_indices = @transform_11, window_bounds = array<i64: 1, 16>}, {pipeline_mode = #tpu.pipeline_mode<synchronous>, transform_indices = @transform_12, window_bounds = array<i64: 16, 32>}, {pipeline_mode = #tpu.pipeline_mode<synchronous>, transform_indices = @transform_13, window_bounds = array<i64: 1, 32>}, {transform_indices = @transform_14, window_bounds = array<i64: 8, 32>}, {transform_indices = @transform_15, window_bounds = array<i64: 8, 32>}]} {
    %c0 = arith.constant 0 : index
    %0 = memref.load %arg1[%c0] : memref<3xf32, #tpu.memory_space<smem>>
    %c1 = arith.constant 1 : index
    %1 = memref.load %arg1[%c1] : memref<3xf32, #tpu.memory_space<smem>>
    %c2 = arith.constant 2 : index
    %2 = memref.load %arg1[%c2] : memref<3xf32, #tpu.memory_space<smem>>
    %c0_0 = arith.constant 0 : index
    %c0_1 = arith.constant 0 : index
    %3 = vector.load %arg2[%c0_0, %c0_1] : memref<8x192xbf16, #tpu.memory_space<vmem>>, vector<8x192xbf16>
    %c0_2 = arith.constant 0 : index
    %c0_3 = arith.constant 0 : index
    %4 = vector.load %arg4[%c0_2, %c0_3] : memref<192x48xbf16, #tpu.memory_space<vmem>>, vector<192x48xbf16>
    %cst = arith.constant dense<0.000000e+00> : vector<8x48xf32>
    %5 = tpu.matmul %3, %4, %cst {dimension_numbers = #tpu.dot_dimension_numbers<[1], [0], [0], [1], [0, 0, 1, 1], [], []>} : vector<8x192xbf16>, vector<192x48xbf16>, vector<8x48xf32> -> vector<8x48xf32>
    %c0_4 = arith.constant 0 : index
    %c0_5 = arith.constant 0 : index
    %6 = vector.load %arg3[%c0_4, %c0_5] : memref<8x1xf32, #tpu.memory_space<vmem>>, vector<8x1xf32>
    %c0_6 = arith.constant 0 : index
    %c0_7 = arith.constant 0 : index
    %7 = vector.load %arg5[%c0_6, %c0_7] : memref<1x48xf32, #tpu.memory_space<vmem>>, vector<1x48xf32>
    %8 = vector.broadcast %6 : vector<8x1xf32> to vector<8x48xf32>
    %9 = vector.broadcast %7 : vector<1x48xf32> to vector<8x48xf32>
    %10 = arith.mulf %8, %9 : vector<8x48xf32>
    %11 = arith.addf %5, %10 : vector<8x48xf32>
    %c0_8 = arith.constant 0 : index
    %c0_9 = arith.constant 0 : index
    %12 = vector.load %arg6[%c0_8, %c0_9] : memref<1x48xf32, #tpu.memory_space<vmem>>, vector<1x48xf32>
    %13 = vector.broadcast %12 : vector<1x48xf32> to vector<8x48xf32>
    %14 = arith.addf %11, %13 : vector<8x48xf32>
    %cst_10 = arith.constant dense<0.000000e+00> : vector<8xf32>
    %15 = vector.multi_reduction <add>, %14, %cst_10 [1] : vector<8x48xf32> to vector<8xf32>
    %16 = vector.shape_cast %15 : vector<8xf32> to vector<8x1xf32>
    %cst_11 = arith.constant 4.800000e+01 : f32
    %17 = vector.broadcast %cst_11 : f32 to vector<8x1xf32>
    %18 = arith.divf %16, %17 : vector<8x1xf32>
    %19 = vector.broadcast %18 : vector<8x1xf32> to vector<8x48xf32>
    %20 = arith.subf %14, %19 : vector<8x48xf32>
    %21 = arith.mulf %20, %20 : vector<8x48xf32>
    %cst_12 = arith.constant dense<0.000000e+00> : vector<8xf32>
    %22 = vector.multi_reduction <add>, %21, %cst_12 [1] : vector<8x48xf32> to vector<8xf32>
    %23 = vector.shape_cast %22 : vector<8xf32> to vector<8x1xf32>
    %cst_13 = arith.constant 4.800000e+01 : f32
    %24 = vector.broadcast %cst_13 : f32 to vector<8x1xf32>
    %25 = arith.divf %23, %24 : vector<8x1xf32>
    %cst_14 = arith.constant 9.99999974E-6 : f32
    %26 = vector.broadcast %cst_14 : f32 to vector<8x1xf32>
    %27 = arith.addf %25, %26 : vector<8x1xf32>
    %28 = math.rsqrt %27 : vector<8x1xf32>
    %29 = vector.broadcast %28 : vector<8x1xf32> to vector<8x48xf32>
    %30 = arith.mulf %20, %29 : vector<8x48xf32>
    %c0_15 = arith.constant 0 : index
    %c0_16 = arith.constant 0 : index
    %31 = vector.load %arg7[%c0_15, %c0_16] : memref<1x48xf32, #tpu.memory_space<vmem>>, vector<1x48xf32>
    %32 = vector.broadcast %31 : vector<1x48xf32> to vector<8x48xf32>
    %33 = arith.mulf %30, %32 : vector<8x48xf32>
    %c0_17 = arith.constant 0 : index
    %c0_18 = arith.constant 0 : index
    %34 = vector.load %arg8[%c0_17, %c0_18] : memref<1x48xf32, #tpu.memory_space<vmem>>, vector<1x48xf32>
    %35 = vector.broadcast %34 : vector<1x48xf32> to vector<8x48xf32>
    %36 = arith.addf %33, %35 : vector<8x48xf32>
    %37 = arith.mulf %36, %36 : vector<8x48xf32>
    %38 = arith.mulf %36, %37 : vector<8x48xf32>
    %cst_19 = arith.constant 4.471500e-02 : f32
    %39 = vector.broadcast %cst_19 : f32 to vector<8x48xf32>
    %40 = arith.mulf %39, %38 : vector<8x48xf32>
    %41 = arith.addf %36, %40 : vector<8x48xf32>
    %cst_20 = arith.constant 0.797884583 : f32
    %42 = vector.broadcast %cst_20 : f32 to vector<8x48xf32>
    %43 = arith.mulf %42, %41 : vector<8x48xf32>
    %44 = math.tanh %43 : vector<8x48xf32>
    %cst_21 = arith.constant 1.000000e+00 : f32
    %45 = vector.broadcast %cst_21 : f32 to vector<8x48xf32>
    %46 = arith.addf %45, %44 : vector<8x48xf32>
    %cst_22 = arith.constant 5.000000e-01 : f32
    %47 = vector.broadcast %cst_22 : f32 to vector<8x48xf32>
    %48 = arith.mulf %47, %46 : vector<8x48xf32>
    %49 = arith.mulf %36, %48 : vector<8x48xf32>
    %50 = arith.truncf %49 : vector<8x48xf32> to vector<8x48xbf16>
    %c0_23 = arith.constant 0 : index
    %c0_24 = arith.constant 0 : index
    %51 = vector.load %arg9[%c0_23, %c0_24] : memref<48x32xbf16, #tpu.memory_space<vmem>>, vector<48x32xbf16>
    %cst_25 = arith.constant dense<0.000000e+00> : vector<8x32xf32>
    %52 = tpu.matmul %50, %51, %cst_25 {dimension_numbers = #tpu.dot_dimension_numbers<[1], [0], [0], [1], [0, 0, 1, 1], [], []>} : vector<8x48xbf16>, vector<48x32xbf16>, vector<8x32xf32> -> vector<8x32xf32>
    %c0_26 = arith.constant 0 : index
    %c0_27 = arith.constant 0 : index
    %53 = vector.load %arg10[%c0_26, %c0_27] : memref<1x32xf32, #tpu.memory_space<vmem>>, vector<1x32xf32>
    %54 = vector.broadcast %53 : vector<1x32xf32> to vector<8x32xf32>
    %55 = arith.addf %52, %54 : vector<8x32xf32>
    %56 = arith.truncf %55 : vector<8x32xf32> to vector<8x32xbf16>
    %c0_28 = arith.constant 0 : index
    %c0_29 = arith.constant 0 : index
    %57 = vector.load %arg11[%c0_28, %c0_29] : memref<32x16xbf16, #tpu.memory_space<vmem>>, vector<32x16xbf16>
    %cst_30 = arith.constant dense<0.000000e+00> : vector<8x16xf32>
    %58 = tpu.matmul %56, %57, %cst_30 {dimension_numbers = #tpu.dot_dimension_numbers<[1], [0], [0], [1], [0, 0, 1, 1], [], []>} : vector<8x32xbf16>, vector<32x16xbf16>, vector<8x16xf32> -> vector<8x16xf32>
    %c0_31 = arith.constant 0 : index
    %c0_32 = arith.constant 0 : index
    %59 = vector.load %arg12[%c0_31, %c0_32] : memref<1x16xf32, #tpu.memory_space<vmem>>, vector<1x16xf32>
    %60 = vector.broadcast %59 : vector<1x16xf32> to vector<8x16xf32>
    %61 = arith.addf %58, %60 : vector<8x16xf32>
    %62 = arith.mulf %61, %61 : vector<8x16xf32>
    %63 = arith.mulf %61, %62 : vector<8x16xf32>
    %cst_33 = arith.constant 4.471500e-02 : f32
    %64 = vector.broadcast %cst_33 : f32 to vector<8x16xf32>
    %65 = arith.mulf %64, %63 : vector<8x16xf32>
    %66 = arith.addf %61, %65 : vector<8x16xf32>
    %cst_34 = arith.constant 0.797884583 : f32
    %67 = vector.broadcast %cst_34 : f32 to vector<8x16xf32>
    %68 = arith.mulf %67, %66 : vector<8x16xf32>
    %69 = math.tanh %68 : vector<8x16xf32>
    %cst_35 = arith.constant 1.000000e+00 : f32
    %70 = vector.broadcast %cst_35 : f32 to vector<8x16xf32>
    %71 = arith.addf %70, %69 : vector<8x16xf32>
    %cst_36 = arith.constant 5.000000e-01 : f32
    %72 = vector.broadcast %cst_36 : f32 to vector<8x16xf32>
    %73 = arith.mulf %72, %71 : vector<8x16xf32>
    %74 = arith.mulf %61, %73 : vector<8x16xf32>
    %75 = arith.truncf %74 : vector<8x16xf32> to vector<8x16xbf16>
    %c0_37 = arith.constant 0 : index
    %c0_38 = arith.constant 0 : index
    %76 = vector.load %arg13[%c0_37, %c0_38] : memref<16x32xbf16, #tpu.memory_space<vmem>>, vector<16x32xbf16>
    %cst_39 = arith.constant dense<0.000000e+00> : vector<8x32xf32>
    %77 = tpu.matmul %75, %76, %cst_39 {dimension_numbers = #tpu.dot_dimension_numbers<[1], [0], [0], [1], [0, 0, 1, 1], [], []>} : vector<8x16xbf16>, vector<16x32xbf16>, vector<8x32xf32> -> vector<8x32xf32>
    %c0_40 = arith.constant 0 : index
    %c0_41 = arith.constant 0 : index
    %78 = vector.load %arg14[%c0_40, %c0_41] : memref<1x32xf32, #tpu.memory_space<vmem>>, vector<1x32xf32>
    %79 = vector.broadcast %78 : vector<1x32xf32> to vector<8x32xf32>
    %80 = arith.addf %77, %79 : vector<8x32xf32>
    %81 = vector.broadcast %2 : f32 to vector<8x32xf32>
    %82 = arith.mulf %80, %81 : vector<8x32xf32>
    %83 = arith.addf %55, %82 : vector<8x32xf32>
    %84 = vector.broadcast %1 : f32 to vector<8x32xf32>
    %85 = arith.mulf %83, %84 : vector<8x32xf32>
    %86 = math.sqrt %0 : f32
    %87 = math.rsqrt %0 : f32
    %cst_42 = arith.constant 0.999989986 : f32
    %88 = arith.mulf %cst_42, %87 : f32
    %89 = arith.mulf %85, %85 : vector<8x32xf32>
    %cst_43 = arith.constant dense<0.000000e+00> : vector<8xf32>
    %90 = vector.multi_reduction <add>, %89, %cst_43 [1] : vector<8x32xf32> to vector<8xf32>
    %91 = vector.shape_cast %90 : vector<8xf32> to vector<8x1xf32>
    %92 = math.sqrt %91 : vector<8x1xf32>
    %cst_44 = arith.constant 1.000000e-07 : f32
    %93 = vector.broadcast %cst_44 : f32 to vector<8x1xf32>
    %94 = arith.maximumf %92, %93 : vector<8x1xf32>
    %95 = vector.broadcast %86 : f32 to vector<8x1xf32>
    %96 = arith.mulf %95, %94 : vector<8x1xf32>
    %97 = math.tanh %96 : vector<8x1xf32>
    %98 = tpu.reciprocal %96 {approx = true} : vector<8x1xf32> -> vector<8x1xf32>
    %99 = arith.mulf %97, %98 : vector<8x1xf32>
    %100 = vector.broadcast %99 : vector<8x1xf32> to vector<8x32xf32>
    %101 = arith.mulf %85, %100 : vector<8x32xf32>
    %102 = vector.broadcast %87 : f32 to vector<8x1xf32>
    %103 = arith.mulf %97, %102 : vector<8x1xf32>
    %cst_45 = arith.constant 1.000000e-07 : f32
    %104 = vector.broadcast %cst_45 : f32 to vector<8x1xf32>
    %105 = arith.maximumf %103, %104 : vector<8x1xf32>
    %106 = tpu.reciprocal %105 {approx = true} : vector<8x1xf32> -> vector<8x1xf32>
    %107 = vector.broadcast %88 : f32 to vector<8x1xf32>
    %108 = arith.mulf %107, %106 : vector<8x1xf32>
    %cst_46 = arith.constant 1.000000e+00 : f32
    %109 = vector.broadcast %cst_46 : f32 to vector<8x1xf32>
    %110 = arith.minimumf %109, %108 : vector<8x1xf32>
    %111 = vector.broadcast %110 : vector<8x1xf32> to vector<8x32xf32>
    %112 = arith.mulf %101, %111 : vector<8x32xf32>
    %113 = vector.broadcast %88 : f32 to vector<8x1xf32>
    %114 = arith.minimumf %105, %113 : vector<8x1xf32>
    %115 = vector.broadcast %86 : f32 to vector<8x1xf32>
    %116 = arith.mulf %115, %114 : vector<8x1xf32>
    %cst_47 = arith.constant 1.000000e+00 : f32
    %117 = vector.broadcast %cst_47 : f32 to vector<8x1xf32>
    %118 = arith.addf %117, %116 : vector<8x1xf32>
    %cst_48 = arith.constant 1.000000e+00 : f32
    %119 = vector.broadcast %cst_48 : f32 to vector<8x1xf32>
    %120 = arith.subf %119, %116 : vector<8x1xf32>
    %121 = arith.divf %118, %120 : vector<8x1xf32>
    %122 = math.log %121 : vector<8x1xf32>
    %cst_49 = arith.constant 5.000000e-01 : f32
    %123 = vector.broadcast %cst_49 : f32 to vector<8x1xf32>
    %124 = arith.mulf %123, %122 : vector<8x1xf32>
    %125 = tpu.reciprocal %116 {approx = true} : vector<8x1xf32> -> vector<8x1xf32>
    %126 = arith.mulf %124, %125 : vector<8x1xf32>
    %c0_50 = arith.constant 0 : index
    %c0_51 = arith.constant 0 : index
    %127 = vector.load %arg15[%c0_50, %c0_51] : memref<8x32xf32, #tpu.memory_space<vmem>>, vector<8x32xf32>
    tpu.vector_store %arg15[%c0_50, %c0_51], %112 {strides = array<i32>} : memref<8x32xf32, #tpu.memory_space<vmem>>, vector<8x32xf32>,
    %cst_52 = arith.constant 1.000000e-07 : f32
    %128 = arith.addf %1, %cst_52 : f32
    %129 = vector.broadcast %128 : f32 to vector<8x1xf32>
    %130 = arith.divf %126, %129 : vector<8x1xf32>
    %131 = vector.broadcast %130 : vector<8x1xf32> to vector<8x32xf32>
    %132 = arith.mulf %112, %131 : vector<8x32xf32>
    %c0_53 = arith.constant 0 : index
    %c0_54 = arith.constant 0 : index
    %133 = vector.load %arg16[%c0_53, %c0_54] : memref<8x32xf32, #tpu.memory_space<vmem>>, vector<8x32xf32>
    tpu.vector_store %arg16[%c0_53, %c0_54], %132 {strides = array<i32>} : memref<8x32xf32, #tpu.memory_space<vmem>>, vector<8x32xf32>,
    return
  }
  func.func @transform_0(%arg0: i32) -> i32 {
    %c0_i32 = arith.constant 0 : i32
    %c0_i32_0 = arith.constant 0 : i32
    return %c0_i32 : i32
  }
  func.func @transform_1(%arg0: i32) -> (i32, i32) {
    %c0_i32 = arith.constant 0 : i32
    %c0_i32_0 = arith.constant 0 : i32
    return %arg0, %c0_i32 : i32, i32
  }
  func.func @transform_2(%arg0: i32) -> (i32, i32) {
    %c0_i32 = arith.constant 0 : i32
    %c0_i32_0 = arith.constant 0 : i32
    return %arg0, %c0_i32 : i32, i32
  }
  func.func @transform_3(%arg0: i32) -> (i32, i32) {
    %c0_i32 = arith.constant 0 : i32
    %c0_i32_0 = arith.constant 0 : i32
    %c0_i32_1 = arith.constant 0 : i32
    return %c0_i32, %c0_i32_0 : i32, i32
  }
  func.func @transform_4(%arg0: i32) -> (i32, i32) {
    %c0_i32 = arith.constant 0 : i32
    %c0_i32_0 = arith.constant 0 : i32
    %c0_i32_1 = arith.constant 0 : i32
    return %c0_i32, %c0_i32_0 : i32, i32
  }
  func.func @transform_5(%arg0: i32) -> (i32, i32) {
    %c0_i32 = arith.constant 0 : i32
    %c0_i32_0 = arith.constant 0 : i32
    %c0_i32_1 = arith.constant 0 : i32
    return %c0_i32, %c0_i32_0 : i32, i32
  }
  func.func @transform_6(%arg0: i32) -> (i32, i32) {
    %c0_i32 = arith.constant 0 : i32
    %c0_i32_0 = arith.constant 0 : i32
    %c0_i32_1 = arith.constant 0 : i32
    return %c0_i32, %c0_i32_0 : i32, i32
  }
  func.func @transform_7(%arg0: i32) -> (i32, i32) {
    %c0_i32 = arith.constant 0 : i32
    %c0_i32_0 = arith.constant 0 : i32
    %c0_i32_1 = arith.constant 0 : i32
    return %c0_i32, %c0_i32_0 : i32, i32
  }
  func.func @transform_8(%arg0: i32) -> (i32, i32) {
    %c0_i32 = arith.constant 0 : i32
    %c0_i32_0 = arith.constant 0 : i32
    %c0_i32_1 = arith.constant 0 : i32
    return %c0_i32, %c0_i32_0 : i32, i32
  }
  func.func @transform_9(%arg0: i32) -> (i32, i32) {
    %c0_i32 = arith.constant 0 : i32
    %c0_i32_0 = arith.constant 0 : i32
    %c0_i32_1 = arith.constant 0 : i32
    return %c0_i32, %c0_i32_0 : i32, i32
  }
  func.func @transform_10(%arg0: i32) -> (i32, i32) {
    %c0_i32 = arith.constant 0 : i32
    %c0_i32_0 = arith.constant 0 : i32
    %c0_i32_1 = arith.constant 0 : i32
    return %c0_i32, %c0_i32_0 : i32, i32
  }
  func.func @transform_11(%arg0: i32) -> (i32, i32) {
    %c0_i32 = arith.constant 0 : i32
    %c0_i32_0 = arith.constant 0 : i32
    %c0_i32_1 = arith.constant 0 : i32
    return %c0_i32, %c0_i32_0 : i32, i32
  }
  func.func @transform_12(%arg0: i32) -> (i32, i32) {
    %c0_i32 = arith.constant 0 : i32
    %c0_i32_0 = arith.constant 0 : i32
    %c0_i32_1 = arith.constant 0 : i32
    return %c0_i32, %c0_i32_0 : i32, i32
  }
  func.func @transform_13(%arg0: i32) -> (i32, i32) {
    %c0_i32 = arith.constant 0 : i32
    %c0_i32_0 = arith.constant 0 : i32
    %c0_i32_1 = arith.constant 0 : i32
    return %c0_i32, %c0_i32_0 : i32, i32
  }
  func.func @transform_14(%arg0: i32) -> (i32, i32) {
    %c0_i32 = arith.constant 0 : i32
    %c0_i32_0 = arith.constant 0 : i32
    return %arg0, %c0_i32 : i32, i32
  }
  func.func @transform_15(%arg0: i32) -> (i32, i32) {
    %c0_i32 = arith.constant 0 : i32
    %c0_i32_0 = arith.constant 0 : i32
    return %arg0, %c0_i32 : i32, i32
  }
}

</mosaic_0001>

<llo_original>
// kernel: wubu_level_forward.1
$region0: #{wubu_level_forward.1}
  #allocation0 [shape = 'u32[]', space=smem, size = 0x4, offset = 0x4, fixed_abs, tag = 'smem constant byte address 0x4 - core index']
  #allocation1 [shape = 'u32[144,128]{1,0:T(1,128)}', space=vmem, size = 0x12000, scoped, tag = 'internal scratch']
  %s0 = inlined_call_operand.vmem [shape: f32[3], index: 0, kind: input, shape index: {}]
  %s1 = inlined_call_operand.vmem [shape: bf16[16,192], index: 1, kind: input, shape index: {}]
  %s2 = inlined_call_operand.vmem [shape: f32[16,1], index: 2, kind: input, shape index: {}]
  %s3 = inlined_call_operand.vmem [shape: bf16[192,48], index: 3, kind: input, shape index: {}]
  %s4 = inlined_call_operand.vmem [shape: f32[1,48], index: 4, kind: input, shape index: {}]
  %s5 = inlined_call_operand.vmem [shape: f32[1,48], index: 5, kind: input, shape index: {}]
  %s6 = inlined_call_operand.vmem [shape: f32[1,48], index: 6, kind: input, shape index: {}]
  %s7 = inlined_call_operand.vmem [shape: f32[1,48], index: 7, kind: input, shape index: {}]
  %s8 = inlined_call_operand.vmem [shape: bf16[48,32], index: 8, kind: input, shape index: {}]
  %s9 = inlined_call_operand.vmem [shape: f32[1,32], index: 9, kind: input, shape index: {}]
  %s10 = inlined_call_operand.vmem [shape: bf16[32,16], index: 10, kind: input, shape index: {}]
  %s11 = inlined_call_operand.vmem [shape: f32[1,16], index: 11, kind: input, shape index: {}]
  %s12 = inlined_call_operand.vmem [shape: bf16[16,32], index: 12, kind: input, shape index: {}]
  %s13 = inlined_call_operand.vmem [shape: f32[1,32], index: 13, kind: input, shape index: {}]
  %s14 = inlined_call_operand.hbm [shape: f32[16,32], index: 14, kind: output, shape index: {0}]
  %s15 = inlined_call_operand.hbm [shape: f32[16,32], index: 15, kind: output, shape index: {1}]
  %16 = xla_tuple %s14, %s15
  %s17 = sld [smem:[#allocation0]]
  $region101: #{wubu_level_forward.1} parent=0
    _
  %s19 = ssub.s32 1, %s17
  %s20 = scalar_select 0, %s19, %s17
  $region1: #{wubu_level_forward.1} parent=0
    #allocation2 [shape = 'u8[512]{0}', space=smem, size = 0x200, scoped, tag = 'input window, operand 0, single buffered']
    #allocation3 [shape = 's32[2]{0}', space=sflag, size = 0x8, scoped, tag = 'scoped memory for wubu_level_forward.1']
    #allocation4 [shape = 's32[2]{0}', space=sflag, size = 0x8, scoped, tag = 'scoped memory for wubu_level_forward.1']
    #allocation5 [shape = 'u8[8192]{0}', space=vmem, size = 0x2000, scoped, tag = 'output window, operand 0']
    #allocation6 [shape = 'u8[8192]{0}', space=vmem, size = 0x2000, scoped, tag = 'output window, operand 1']
    #allocation7 [shape = 's32[2]{0}', space=sflag, size = 0x8, scoped, tag = 'scoped memory for wubu_level_forward.1']
    %21 = vsyncpa [#allocation4], 0
    %22 = vsyncpa [#allocation3], 0
    %s23 = scalar_lea.sflag [#allocation3], 1
    %24 = vsyncpa %s23, 0
    %25 = vsyncpa [#allocation7], 0
    %s26 = scalar_lea.sflag [#allocation7], 1
    %27 = vsyncpa %s26, 0
    loop: start=0, step=1, limit=4
    $region2: #{wubu_level_forward.1} parent=1 // loop_pre_header
      _
    $region3: #{wubu_level_forward.1} parent=1 // loop_header
      %s29 = sphi 0, %s33
      %p30 = scmp.ge.s32.totalorder %s29, 4
      %s37 = sphi 0, %s37
      %s39 = sphi 0, %s37
      %s40 = sphi 0, %s39
      %s54 = sphi 0, %s40
      %s60 = sphi 0, %s62
      %s63 = sphi 0, %s60
      %s64 = sphi 0, %s63
      %s80 = sphi 0, %s64
      %s86 = sphi 0, %s88
      %s89 = sphi 0, %s86
      %s90 = sphi 0, %s89
      %s106 = sphi 0, %s90
      %s110 = sphi 0, %s110
      %s112 = sphi 0, %s110
      %s113 = sphi 0, %s112
      %s127 = sphi 0, %s113
      %s131 = sphi 0, %s131
      %s133 = sphi 0, %s131
      %s134 = sphi 0, %s133
      %s148 = sphi 0, %s134
      %s152 = sphi 0, %s152
      %s154 = sphi 0, %s152
      %s155 = sphi 0, %s154
      %s169 = sphi 0, %s155
      %s173 = sphi 0, %s173
      %s175 = sphi 0, %s173
      %s176 = sphi 0, %s175
      %s190 = sphi 0, %s176
      %s194 = sphi 0, %s194
      %s196 = sphi 0, %s194
      %s197 = sphi 0, %s196
      %s211 = sphi 0, %s197
      %s215 = sphi 0, %s215
      %s217 = sphi 0, %s215
      %s218 = sphi 0, %s217
      %s232 = sphi 0, %s218
      %s236 = sphi 0, %s236
      %s238 = sphi 0, %s236
      %s239 = sphi 0, %s238
      %s253 = sphi 0, %s239
      %s257 = sphi 0, %s257
      %s259 = sphi 0, %s257
      %s260 = sphi 0, %s259
      %s274 = sphi 0, %s260
      %s278 = sphi 0, %s278
      %s280 = sphi 0, %s278
      %s281 = sphi 0, %s280
      %s295 = sphi 0, %s281
      %s299 = sphi 0, %s299
      %s301 = sphi 0, %s299
      %s302 = sphi 0, %s301
      %s316 = sphi 0, %s302
      %s320 = sphi 0, %s320
      %s322 = sphi 0, %s320
      %s323 = sphi 0, %s322
      %s337 = sphi 0, %s323
      %s343 = sphi 0, %s345
      %s346 = sphi 0, %s343
      %s347 = sphi 0, %s346
      %s363 = sphi 0, %s347
      %s369 = sphi 0, %s371
      %s372 = sphi 0, %s369
      %s373 = sphi 0, %s372
      %s389 = sphi 0, %s373
    $region4: #{wubu_level_forward.1} parent=1 // loop_header_branch
      %32 = sbr.rel (%p30) target = $region8
    $region5: #{wubu_level_forward.1} parent=1 // loop_body
      %s34 = ssub.s32 %s29, 1
      %s35 = ssub.s32 %s29, 2
      %s36 = sadd.s32 %s29, 1
      %s38 = sadd.s32 %s37, 1
      %p41 = scmp.eq.s32.totalorder %s29, 1
      %p42 = scmp.ne.s32.totalorder %s37, %s39
      %p43 = scmp.eq.s32.totalorder %s29, 0
      %p44 = por %p42, %p43
      %p45 = scmp.ne.s32.totalorder %s37, %s39
      %p46 = scmp.eq.s32.totalorder %s34, 1
      %p47 = por %p45, %p46
      %p48 = scmp.ne.s32.totalorder %s39, %s40
      %p49 = scmp.eq.s32.totalorder %s34, 0
      %p50 = por %p48, %p49
      %p51 = scmp.ne.s32.totalorder %s39, %s40
      %p52 = scmp.eq.s32.totalorder %s35, 1
      %p53 = por %p51, %p52
      %p55 = scmp.ne.s32.totalorder %s40, %s54
      %p56 = scmp.eq.s32.totalorder %s35, 0
      %p57 = por %p55, %p56
      %s58 = ssub.s32 %s29, %s36
      %p59 = scmp.eq.s32.totalorder %s58, 0
      %s61 = sadd.s32 %s60, 1
      %s62 = scalar_select %p59, %s60, %s61
      %p65 = pneg %p59
      %p66 = scmp.eq.s32.totalorder %s29, 1
      %p67 = por %p65, %p66
      %p68 = scmp.ne.s32.totalorder %s60, %s63
      %p69 = scmp.eq.s32.totalorder %s29, 0
      %p70 = por %p68, %p69
      %p71 = scmp.ne.s32.totalorder %s60, %s63
      %p72 = scmp.eq.s32.totalorder %s34, 1
      %p73 = por %p71, %p72
      %p74 = scmp.ne.s32.totalorder %s63, %s64
      %p75 = scmp.eq.s32.totalorder %s34, 0
      %p76 = por %p74, %p75
      %p77 = scmp.ne.s32.totalorder %s63, %s64
      %p78 = scmp.eq.s32.totalorder %s35, 1
      %p79 = por %p77, %p78
      %p81 = scmp.ne.s32.totalorder %s64, %s80
      %p82 = scmp.eq.s32.totalorder %s35, 0
      %p83 = por %p81, %p82
      %s84 = ssub.s32 %s29, %s36
      %p85 = scmp.eq.s32.totalorder %s84, 0
      %s87 = sadd.s32 %s86, 1
      %s88 = scalar_select %p85, %s86, %s87
      %p91 = pneg %p85
      %p92 = scmp.eq.s32.totalorder %s29, 1
      %p93 = por %p91, %p92
      %p94 = scmp.ne.s32.totalorder %s86, %s89
      %p95 = scmp.eq.s32.totalorder %s29, 0
      %p96 = por %p94, %p95
      %p97 = scmp.ne.s32.totalorder %s86, %s89
      %p98 = scmp.eq.s32.totalorder %s34, 1
      %p99 = por %p97, %p98
      %p100 = scmp.ne.s32.totalorder %s89, %s90
      %p101 = scmp.eq.s32.totalorder %s34, 0
      %p102 = por %p100, %p101
      %p103 = scmp.ne.s32.totalorder %s89, %s90
      %p104 = scmp.eq.s32.totalorder %s35, 1
      %p105 = por %p103, %p104
      %p107 = scmp.ne.s32.totalorder %s90, %s106
      %p108 = scmp.eq.s32.totalorder %s35, 0
      %p109 = por %p107, %p108
      %s111 = sadd.s32 %s110, 1
      %p114 = scmp.eq.s32.totalorder %s29, 1
      %p115 = scmp.ne.s32.totalorder %s110, %s112
      %p116 = scmp.eq.s32.totalorder %s29, 0
      %p117 = por %p115, %p116
      %p118 = scmp.ne.s32.totalorder %s110, %s112
      %p119 = scmp.eq.s32.totalorder %s34, 1
      %p120 = por %p118, %p119
      %p121 = scmp.ne.s32.totalorder %s112, %s113
      %p122 = scmp.eq.s32.totalorder %s34, 0
      %p123 = por %p121, %p122
      %p124 = scmp.ne.s32.totalorder %s112, %s113
      %p125 = scmp.eq.s32.totalorder %s35, 1
      %p126 = por %p124, %p125
      %p128 = scmp.ne.s32.totalorder %s113, %s127
      %p129 = scmp.eq.s32.totalorder %s35, 0
      %p130 = por %p128, %p129
      %s132 = sadd.s32 %s131, 1
      %p135 = scmp.eq.s32.totalorder %s29, 1
      %p136 = scmp.ne.s32.totalorder %s131, %s133
      %p137 = scmp.eq.s32.totalorder %s29, 0
      %p138 = por %p136, %p137
      %p139 = scmp.ne.s32.totalorder %s131, %s133
      %p140 = scmp.eq.s32.totalorder %s34, 1
      %p141 = por %p139, %p140
      %p142 = scmp.ne.s32.totalorder %s133, %s134
      %p143 = scmp.eq.s32.totalorder %s34, 0
      %p144 = por %p142, %p143
      %p145 = scmp.ne.s32.totalorder %s133, %s134
      %p146 = scmp.eq.s32.totalorder %s35, 1
      %p147 = por %p145, %p146
      %p149 = scmp.ne.s32.totalorder %s134, %s148
      %p150 = scmp.eq.s32.totalorder %s35, 0
      %p151 = por %p149, %p150
      %s153 = sadd.s32 %s152, 1
      %p156 = scmp.eq.s32.totalorder %s29, 1
      %p157 = scmp.ne.s32.totalorder %s152, %s154
      %p158 = scmp.eq.s32.totalorder %s29, 0
      %p159 = por %p157, %p158
      %p160 = scmp.ne.s32.totalorder %s152, %s154
      %p161 = scmp.eq.s32.totalorder %s34, 1
      %p162 = por %p160, %p161
      %p163 = scmp.ne.s32.totalorder %s154, %s155
      %p164 = scmp.eq.s32.totalorder %s34, 0
      %p165 = por %p163, %p164
      %p166 = scmp.ne.s32.totalorder %s154, %s155
      %p167 = scmp.eq.s32.totalorder %s35, 1
      %p168 = por %p166, %p167
      %p170 = scmp.ne.s32.totalorder %s155, %s169
      %p171 = scmp.eq.s32.totalorder %s35, 0
      %p172 = por %p170, %p171
      %s174 = sadd.s32 %s173, 1
      %p177 = scmp.eq.s32.totalorder %s29, 1
      %p178 = scmp.ne.s32.totalorder %s173, %s175
      %p179 = scmp.eq.s32.totalorder %s29, 0
      %p180 = por %p178, %p179
      %p181 = scmp.ne.s32.totalorder %s173, %s175
      %p182 = scmp.eq.s32.totalorder %s34, 1
      %p183 = por %p181, %p182
      %p184 = scmp.ne.s32.totalorder %s175, %s176
      %p185 = scmp.eq.s32.totalorder %s34, 0
      %p186 = por %p184, %p185
      %p187 = scmp.ne.s32.totalorder %s175, %s176
      %p188 = scmp.eq.s32.totalorder %s35, 1
      %p189 = por %p187, %p188
      %p191 = scmp.ne.s32.totalorder %s176, %s190
      %p192 = scmp.eq.s32.totalorder %s35, 0
      %p193 = por %p191, %p192
      %s195 = sadd.s32 %s194, 1
      %p198 = scmp.eq.s32.totalorder %s29, 1
      %p199 = scmp.ne.s32.totalorder %s194, %s196
      %p200 = scmp.eq.s32.totalorder %s29, 0
      %p201 = por %p199, %p200
      %p202 = scmp.ne.s32.totalorder %s194, %s196
      %p203 = scmp.eq.s32.totalorder %s34, 1
      %p204 = por %p202, %p203
      %p205 = scmp.ne.s32.totalorder %s196, %s197
      %p206 = scmp.eq.s32.totalorder %s34, 0
      %p207 = por %p205, %p206
      %p208 = scmp.ne.s32.totalorder %s196, %s197
      %p209 = scmp.eq.s32.totalorder %s35, 1
      %p210 = por %p208, %p209
      %p212 = scmp.ne.s32.totalorder %s197, %s211
      %p213 = scmp.eq.s32.totalorder %s35, 0
      %p214 = por %p212, %p213
      %s216 = sadd.s32 %s215, 1
      %p219 = scmp.eq.s32.totalorder %s29, 1
      %p220 = scmp.ne.s32.totalorder %s215, %s217
      %p221 = scmp.eq.s32.totalorder %s29, 0
      %p222 = por %p220, %p221
      %p223 = scmp.ne.s32.totalorder %s215, %s217
      %p224 = scmp.eq.s32.totalorder %s34, 1
      %p225 = por %p223, %p224
      %p226 = scmp.ne.s32.totalorder %s217, %s218
      %p227 = scmp.eq.s32.totalorder %s34, 0
      %p228 = por %p226, %p227
      %p229 = scmp.ne.s32.totalorder %s217, %s218
      %p230 = scmp.eq.s32.totalorder %s35, 1
      %p231 = por %p229, %p230
      %p233 = scmp.ne.s32.totalorder %s218, %s232
      %p234 = scmp.eq.s32.totalorder %s35, 0
      %p235 = por %p233, %p234
      %s237 = sadd.s32 %s236, 1
      %p240 = scmp.eq.s32.totalorder %s29, 1
      %p241 = scmp.ne.s32.totalorder %s236, %s238
      %p242 = scmp.eq.s32.totalorder %s29, 0
      %p243 = por %p241, %p242
      %p244 = scmp.ne.s32.totalorder %s236, %s238
      %p245 = scmp.eq.s32.totalorder %s34, 1
      %p246 = por %p244, %p245
      %p247 = scmp.ne.s32.totalorder %s238, %s239
      %p248 = scmp.eq.s32.totalorder %s34, 0
      %p249 = por %p247, %p248
      %p250 = scmp.ne.s32.totalorder %s238, %s239
      %p251 = scmp.eq.s32.totalorder %s35, 1
      %p252 = por %p250, %p251
      %p254 = scmp.ne.s32.totalorder %s239, %s253
      %p255 = scmp.eq.s32.totalorder %s35, 0
      %p256 = por %p254, %p255
      %s258 = sadd.s32 %s257, 1
      %p261 = scmp.eq.s32.totalorder %s29, 1
      %p262 = scmp.ne.s32.totalorder %s257, %s259
      %p263 = scmp.eq.s32.totalorder %s29, 0
      %p264 = por %p262, %p263
      %p265 = scmp.ne.s32.totalorder %s257, %s259
      %p266 = scmp.eq.s32.totalorder %s34, 1
      %p267 = por %p265, %p266
      %p268 = scmp.ne.s32.totalorder %s259, %s260
      %p269 = scmp.eq.s32.totalorder %s34, 0
      %p270 = por %p268, %p269
      %p271 = scmp.ne.s32.totalorder %s259, %s260
      %p272 = scmp.eq.s32.totalorder %s35, 1
      %p273 = por %p271, %p272
      %p275 = scmp.ne.s32.totalorder %s260, %s274
      %p276 = scmp.eq.s32.totalorder %s35, 0
      %p277 = por %p275, %p276
      %s279 = sadd.s32 %s278, 1
      %p282 = scmp.eq.s32.totalorder %s29, 1
      %p283 = scmp.ne.s32.totalorder %s278, %s280
      %p284 = scmp.eq.s32.totalorder %s29, 0
      %p285 = por %p283, %p284
      %p286 = scmp.ne.s32.totalorder %s278, %s280
      %p287 = scmp.eq.s32.totalorder %s34, 1
      %p288 = por %p286, %p287
      %p289 = scmp.ne.s32.totalorder %s280, %s281
      %p290 = scmp.eq.s32.totalorder %s34, 0
      %p291 = por %p289, %p290
      %p292 = scmp.ne.s32.totalorder %s280, %s281
      %p293 = scmp.eq.s32.totalorder %s35, 1
      %p294 = por %p292, %p293
      %p296 = scmp.ne.s32.totalorder %s281, %s295
      %p297 = scmp.eq.s32.totalorder %s35, 0
      %p298 = por %p296, %p297
      %s300 = sadd.s32 %s299, 1
      %p303 = scmp.eq.s32.totalorder %s29, 1
      %p304 = scmp.ne.s32.totalorder %s299, %s301
      %p305 = scmp.eq.s32.totalorder %s29, 0
      %p306 = por %p304, %p305
      %p307 = scmp.ne.s32.totalorder %s299, %s301
      %p308 = scmp.eq.s32.totalorder %s34, 1
      %p309 = por %p307, %p308
      %p310 = scmp.ne.s32.totalorder %s301, %s302
      %p311 = scmp.eq.s32.totalorder %s34, 0
      %p312 = por %p310, %p311
      %p313 = scmp.ne.s32.totalorder %s301, %s302
      %p314 = scmp.eq.s32.totalorder %s35, 1
      %p315 = por %p313, %p314
      %p317 = scmp.ne.s32.totalorder %s302, %s316
      %p318 = scmp.eq.s32.totalorder %s35, 0
      %p319 = por %p317, %p318
      %s321 = sadd.s32 %s320, 1
      %p324 = scmp.eq.s32.totalorder %s29, 1
      %p325 = scmp.ne.s32.totalorder %s320, %s322
      %p326 = scmp.eq.s32.totalorder %s29, 0
      %p327 = por %p325, %p326
      %p328 = scmp.ne.s32.totalorder %s320, %s322
      %p329 = scmp.eq.s32.totalorder %s34, 1
      %p330 = por %p328, %p329
      %p331 = scmp.ne.s32.totalorder %s322, %s323
      %p332 = scmp.eq.s32.totalorder %s34, 0
      %p333 = por %p331, %p332
      %p334 = scmp.ne.s32.totalorder %s322, %s323
      %p335 = scmp.eq.s32.totalorder %s35, 1
      %p336 = por %p334, %p335
      %p338 = scmp.ne.s32.totalorder %s323, %s337
      %p339 = scmp.eq.s32.totalorder %s35, 0
      %p340 = por %p338, %p339
      %s341 = ssub.s32 %s29, %s36
      %p342 = scmp.eq.s32.totalorder %s341, 0
      %s344 = sadd.s32 %s343, 1
      %s345 = scalar_select %p342, %s343, %s344
      %p348 = pneg %p342
      %p349 = scmp.eq.s32.totalorder %s29, 1
      %p350 = por %p348, %p349
      %p351 = scmp.ne.s32.totalorder %s343, %s346
      %p352 = scmp.eq.s32.totalorder %s29, 0
      %p353 = por %p351, %p352
      %p354 = scmp.ne.s32.totalorder %s343, %s346
      %p355 = scmp.eq.s32.totalorder %s34, 1
      %p356 = por %p354, %p355
      %p357 = scmp.ne.s32.totalorder %s346, %s347
      %p358 = scmp.eq.s32.totalorder %s34, 0
      %p359 = por %p357, %p358
      %p360 = scmp.ne.s32.totalorder %s346, %s347
      %p361 = scmp.eq.s32.totalorder %s35, 1
      %p362 = por %p360, %p361
      %p364 = scmp.ne.s32.totalorder %s347, %s363
      %p365 = scmp.eq.s32.totalorder %s35, 0
      %p366 = por %p364, %p365
      %s367 = ssub.s32 %s29, %s36
      %p368 = scmp.eq.s32.totalorder %s367, 0
      %s370 = sadd.s32 %s369, 1
      %s371 = scalar_select %p368, %s369, %s370
      %p374 = pneg %p368
      %p375 = scmp.eq.s32.totalorder %s29, 1
      %p376 = por %p374, %p375
      %p377 = scmp.ne.s32.totalorder %s369, %s372
      %p378 = scmp.eq.s32.totalorder %s29, 0
      %p379 = por %p377, %p378
      %p380 = scmp.ne.s32.totalorder %s369, %s372
      %p381 = scmp.eq.s32.totalorder %s34, 1
      %p382 = por %p380, %p381
      %p383 = scmp.ne.s32.totalorder %s372, %s373
      %p384 = scmp.eq.s32.totalorder %s34, 0
      %p385 = por %p383, %p384
      %p386 = scmp.ne.s32.totalorder %s372, %s373
      %p387 = scmp.eq.s32.totalorder %s35, 1
      %p388 = por %p386, %p387
      %p390 = scmp.ne.s32.totalorder %s373, %s389
      %p391 = scmp.eq.s32.totalorder %s35, 0
      %p392 = por %p390, %p391
      %p393 = scmp.le.s32.totalorder 1, %s29
      %p394 = scmp.lt.s32.totalorder %s29, 3
      %p395 = pnand %p393, %p394
      %p396 = pneg %p395
      // Predicated region
      $region9: #{wubu_level_forward.1} parent=5 // pred_check
        _
      $region10: #{wubu_level_forward.1} parent=5 // pred_check_branch
        %398 = sbr.rel (%p395) target = $region12
      $region11: #{wubu_level_forward.1} parent=5 // pred_region
        %s399 = ssub.s32 %s29, 1
        // Predicated region
        $region13: #{wubu_level_forward.1} parent=11 // pred_check
          %p400 = pneg %p50
        $region14: #{wubu_level_forward.1} parent=11 // pred_check_branch
          %402 = sbr.rel (%p400) target = $region16
        $region15: #{wubu_level_forward.1} parent=11 // pred_region
          %s404 = ssub.s32 16, 16
          %405 = vsyncadd [#allocation4], %s404
          %s407 = sshll.u32 %s0, 4
          %s408 = int_to_ptr.vmem [resolvable:$true] %s407
          %410 = dma.vmem_to_smem %s408, 16, [#allocation2], [#allocation4]
        $region16: #{wubu_level_forward.1} parent=11 // pred_fallthru
          _
        // Predicated region
        $region17: #{wubu_level_forward.1} parent=11 // pred_check
          %p411 = pneg %p123
        $region18: #{wubu_level_forward.1} parent=11 // pred_check_branch
          %413 = sbr.rel (%p411) target = $region20
        $region19: #{wubu_level_forward.1} parent=11 // pred_region
          _
        $region20: #{wubu_level_forward.1} parent=11 // pred_fallthru
          _
        // Predicated region
        $region21: #{wubu_level_forward.1} parent=11 // pred_check
          %p414 = pneg %p144
        $region22: #{wubu_level_forward.1} parent=11 // pred_check_branch
          %416 = sbr.rel (%p414) target = $region24
        $region23: #{wubu_level_forward.1} parent=11 // pred_region
          _
        $region24: #{wubu_level_forward.1} parent=11 // pred_fallthru
          _
        // Predicated region
        $region25: #{wubu_level_forward.1} parent=11 // pred_check
          %p417 = pneg %p165
        $region26: #{wubu_level_forward.1} parent=11 // pred_check_branch
          %419 = sbr.rel (%p417) target = $region28
        $region27: #{wubu_level_forward.1} parent=11 // pred_region
          _
        $region28: #{wubu_level_forward.1} parent=11 // pred_fallthru
          _
        // Predicated region
        $region29: #{wubu_level_forward.1} parent=11 // pred_check
          %p420 = pneg %p186
        $region30: #{wubu_level_forward.1} parent=11 // pred_check_branch
          %422 = sbr.rel (%p420) target = $region32
        $region31: #{wubu_level_forward.1} parent=11 // pred_region
          _
        $region32: #{wubu_level_forward.1} parent=11 // pred_fallthru
          _
        // Predicated region
        $region33: #{wubu_level_forward.1} parent=11 // pred_check
          %p423 = pneg %p207
        $region34: #{wubu_level_forward.1} parent=11 // pred_check_branch
          %425 = sbr.rel (%p423) target = $region36
        $region35: #{wubu_level_forward.1} parent=11 // pred_region
          _
        $region36: #{wubu_level_forward.1} parent=11 // pred_fallthru
          _
        // Predicated region
        $region37: #{wubu_level_forward.1} parent=11 // pred_check
          %p426 = pneg %p228
        $region38: #{wubu_level_forward.1} parent=11 // pred_check_branch
          %428 = sbr.rel (%p426) target = $region40
        $region39: #{wubu_level_forward.1} parent=11 // pred_region
          _
        $region40: #{wubu_level_forward.1} parent=11 // pred_fallthru
          _
        // Predicated region
        $region41: #{wubu_level_forward.1} parent=11 // pred_check
          %p429 = pneg %p249
        $region42: #{wubu_level_forward.1} parent=11 // pred_check_branch
          %431 = sbr.rel (%p429) target = $region44
        $region43: #{wubu_level_forward.1} parent=11 // pred_region
          _
        $region44: #{wubu_level_forward.1} parent=11 // pred_fallthru
          _
        // Predicated region
        $region45: #{wubu_level_forward.1} parent=11 // pred_check
          %p432 = pneg %p270
        $region46: #{wubu_level_forward.1} parent=11 // pred_check_branch
          %434 = sbr.rel (%p432) target = $region48
        $region47: #{wubu_level_forward.1} parent=11 // pred_region
          _
        $region48: #{wubu_level_forward.1} parent=11 // pred_fallthru
          _
        // Predicated region
        $region49: #{wubu_level_forward.1} parent=11 // pred_check
          %p435 = pneg %p291
        $region50: #{wubu_level_forward.1} parent=11 // pred_check_branch
          %437 = sbr.rel (%p435) target = $region52
        $region51: #{wubu_level_forward.1} parent=11 // pred_region
          _
        $region52: #{wubu_level_forward.1} parent=11 // pred_fallthru
          _
        // Predicated region
        $region53: #{wubu_level_forward.1} parent=11 // pred_check
          %p438 = pneg %p312
        $region54: #{wubu_level_forward.1} parent=11 // pred_check_branch
          %440 = sbr.rel (%p438) target = $region56
        $region55: #{wubu_level_forward.1} parent=11 // pred_region
          _
        $region56: #{wubu_level_forward.1} parent=11 // pred_fallthru
          _
        // Predicated region
        $region57: #{wubu_level_forward.1} parent=11 // pred_check
          %p441 = pneg %p333
        $region58: #{wubu_level_forward.1} parent=11 // pred_check_branch
          %443 = sbr.rel (%p441) target = $region60
        $region59: #{wubu_level_forward.1} parent=11 // pred_region
          _
        $region60: #{wubu_level_forward.1} parent=11 // pred_fallthru
          _
      $region12: #{wubu_level_forward.1} parent=5 // pred_fallthru
        _
      %p444 = scmp.lt.s32.totalorder %s29, 2
      // Predicated region
      $region61: #{wubu_level_forward.1} parent=5 // pred_check
        %p445 = pneg %p444
      $region62: #{wubu_level_forward.1} parent=5 // pred_check_branch
        %447 = sbr.rel (%p445) target = $region64
      $region63: #{wubu_level_forward.1} parent=5 // pred_region
        // Predicated region
        $region65: #{wubu_level_forward.1} parent=63 // pred_check
          %p448 = pneg %p70
        $region66: #{wubu_level_forward.1} parent=63 // pred_check_branch
          %450 = sbr.rel (%p448) target = $region68
        $region67: #{wubu_level_forward.1} parent=63 // pred_region
          %p451 = scmp.lt.s32.totalorder %s29, 1
          %s452 = scalar_select %p451, %s29, 1
          %s453 = smul.addr %s452, 2
          %s454 = smul.addr %s453, 4
          %s455 = scalar_lea.vmem %s1, %s454
        $region68: #{wubu_level_forward.1} parent=63 // pred_fallthru
          _
        // Predicated region
        $region69: #{wubu_level_forward.1} parent=63 // pred_check
          %p456 = pneg %p96
        $region70: #{wubu_level_forward.1} parent=63 // pred_check_branch
          %458 = sbr.rel (%p456) target = $region72
        $region71: #{wubu_level_forward.1} parent=63 // pred_region
          %p459 = scmp.lt.s32.totalorder %s29, 1
          %s460 = scalar_select %p459, %s29, 1
          %s461 = smul.addr %s460, 8
          %s462 = scalar_lea.vmem %s2, %s461
        $region72: #{wubu_level_forward.1} parent=63 // pred_fallthru
          _
      $region64: #{wubu_level_forward.1} parent=5 // pred_fallthru
        _
      %p463 = scmp.le.s32.totalorder 1, %s29
      %p464 = scmp.lt.s32.totalorder %s29, 3
      %p465 = pnand %p463, %p464
      %p466 = pneg %p465
      // Predicated region
      $region73: #{wubu_level_forward.1} parent=5 // pred_check
        _
      $region74: #{wubu_level_forward.1} parent=5 // pred_check_branch
        %468 = sbr.rel (%p465) target = $region76
      $region75: #{wubu_level_forward.1} parent=5 // pred_region
        %s469 = ssub.s32 %s29, 1
        // Predicated region
        $region77: #{wubu_level_forward.1} parent=75 // pred_check
          %p470 = pneg %p50
        $region78: #{wubu_level_forward.1} parent=75 // pred_check_branch
          %472 = sbr.rel (%p470) target = $region80
        $region79: #{wubu_level_forward.1} parent=75 // pred_region
          %473 = dma.done [#allocation4], 16
        $region80: #{wubu_level_forward.1} parent=75 // pred_fallthru
          _
        %474 = sfence
        %p475 = pneg %p50
        %p476 = pneg %p47
        %p477 = scmp.lt.s32.totalorder %s34, 1
        %s478 = scalar_select %p477, %s34, 1
        %s479 = smul.addr %s478, 2
        %s480 = smul.addr %s479, 4
        %s481 = scalar_lea.vmem %s1, %s480
        %p482 = pneg %p76
        %p483 = pneg %p73
        %p484 = scmp.lt.s32.totalorder %s34, 1
        %s485 = scalar_select %p484, %s34, 1
        %s486 = smul.addr %s485, 8
        %s487 = scalar_lea.vmem %s2, %s486
        %p488 = pneg %p102
        %p489 = pneg %p99
        %p490 = pneg %p123
        %p491 = pneg %p120
        %p492 = pneg %p144
        %p493 = pneg %p141
        %p494 = pneg %p165
        %p495 = pneg %p162
        %p496 = pneg %p186
        %p497 = pneg %p183
        %p498 = pneg %p207
        %p499 = pneg %p204
        %p500 = pneg %p228
        %p501 = pneg %p225
        %p502 = pneg %p249
        %p503 = pneg %p246
        %p504 = pneg %p270
        %p505 = pneg %p267
        %p506 = pneg %p291
        %p507 = pneg %p288
        %p508 = pneg %p312
        %p509 = pneg %p309
        %p510 = pneg %p333
        %p511 = pneg %p330
        %p512 = pneg %p359
        %p513 = pneg %p356
        %s514 = sand.u32 %s346, 1
        %s515 = scalar_lea.sflag [#allocation3], %s514
        %s516 = sand.u32 %s346, 1
        %s517 = smul.addr %s516, 8
        %s518 = scalar_lea.vmem [#allocation5], %s517
        %p519 = pneg %p385
        %p520 = pneg %p382
        %s521 = sand.u32 %s372, 1
        %s522 = scalar_lea.sflag [#allocation7], %s521
        %s523 = sand.u32 %s372, 1
        %s524 = smul.addr %s523, 8
        %s525 = scalar_lea.vmem [#allocation6], %s524
        %p526 = scmp.lt.s32.totalorder %s34, 1
        %s527 = scalar_select %p526, %s34, 1
        %s528 = smul.addr %s527, 2
        %s529 = smul.addr %s528, 4
        %s530 = scalar_lea.vmem %s1, %s529
        %p531 = scmp.lt.s32.totalorder %s34, 1
        %s532 = scalar_select %p531, %s34, 1
        %s533 = smul.addr %s532, 8
        %s534 = scalar_lea.vmem %s2, %s533
        %s536 = sld [smem:[#allocation2]]
        %s537 = sld [smem:[#allocation2 + $0x1]]
        %s538 = sld [smem:[#allocation2 + $0x2]]
        %v539 = vld [vmem:[%s530] sm:$0xff]
        %v540 = vld [vmem:[%s3] sm:$0xf]
        %v541 = vld [vmem:[%s3 + $0x4] sm:$0xf]
        %v542 = vld [vmem:[%s3 + $0x8] sm:$0xf]
        %v543 = vld [vmem:[%s3 + $0xc] sm:$0xf]
        %v544 = vld [vmem:[%s3 + $0x10] sm:$0xf]
        %v545 = vld [vmem:[%s3 + $0x14] sm:$0xf]
        %v546 = vld [vmem:[%s3 + $0x18] sm:$0xf]
        %v547 = vld [vmem:[%s3 + $0x1c] sm:$0xf]
        %v548 = vld [vmem:[%s3 + $0x20] sm:$0xf]
        %v549 = vld [vmem:[%s3 + $0x24] sm:$0xf]
        %v550 = vld [vmem:[%s3 + $0x28] sm:$0xf]
        %v551 = vld [vmem:[%s3 + $0x2c] sm:$0xf]
        %v552 = vld [vmem:[%s3 + $0x30] sm:$0xf]
        %v553 = vld [vmem:[%s3 + $0x34] sm:$0xf]
        %v554 = vld [vmem:[%s3 + $0x38] sm:$0xf]
        %v555 = vld [vmem:[%s3 + $0x3c] sm:$0xf]
        %v556 = vld [vmem:[%s3 + $0x40] sm:$0xf]
        %v557 = vld [vmem:[%s3 + $0x44] sm:$0xf]
        %v558 = vld [vmem:[%s3 + $0x48] sm:$0xf]
        %v559 = vld [vmem:[%s3 + $0x4c] sm:$0xf]
        %v560 = vld [vmem:[%s3 + $0x50] sm:$0xf]
        %v561 = vld [vmem:[%s3 + $0x54] sm:$0xf]
        %v562 = vld [vmem:[%s3 + $0x58] sm:$0xf]
        %v563 = vld [vmem:[%s3 + $0x5c] sm:$0xf]
        %v564 = vld [vmem:[%s534] sm:$0xff]
        %v565 = vld [vmem:[%s4] sm:$0x1]
        %567 = vset.pattern.permute.xlu0 0
        %568 = vperm.xlu0 %567, %v564
        %v569 = vpop.permute.xlu0 %568
        %v572 = vlaneseq
        %v573 = vshrl.u32 %v572, 7
        %v574 = vsub.s32 0, %v573
        %v575 = vrot.slane %v565, %v574
        %v577 = vmul.f32 %v569, %v575
        %v579 = vunpack.c.l.b16 %v539
        %v580 = vunpack.c.h.b16 %v539
        %v581 = vpack.c.b16 %v579, %v579
        %v582 = vpack.c.b16 %v580, %v580
        %v608 = vunpack.c.l.b16 %v540
        %v609 = vunpack.c.l.b16 %v541
        %v610 = vunpack.c.l.b16 %v542
        %v611 = vunpack.c.l.b16 %v543
        %v612 = vunpack.c.l.b16 %v544
        %v613 = vunpack.c.l.b16 %v545
        %v614 = vunpack.c.l.b16 %v546
        %v615 = vunpack.c.l.b16 %v547
        %v616 = vunpack.c.l.b16 %v548
        %v617 = vunpack.c.l.b16 %v549
        %v618 = vunpack.c.l.b16 %v550
        %v619 = vunpack.c.l.b16 %v551
        %v620 = vunpack.c.l.b16 %v552
        %v621 = vunpack.c.l.b16 %v553
        %v622 = vunpack.c.l.b16 %v554
        %v623 = vunpack.c.l.b16 %v555
        %v624 = vunpack.c.l.b16 %v556
        %v625 = vunpack.c.l.b16 %v557
        %v626 = vunpack.c.l.b16 %v558
        %v627 = vunpack.c.l.b16 %v559
        %v628 = vunpack.c.l.b16 %v560
        %v629 = vunpack.c.l.b16 %v561
        %v630 = vunpack.c.l.b16 %v562
        %v631 = vunpack.c.l.b16 %v563
        %v632 = vpack.c.b16 %v609, %v608
        %v633 = vpack.c.b16 %v611, %v610
        %v634 = vpack.c.b16 %v613, %v612
        %v635 = vpack.c.b16 %v615, %v614
        %v636 = vpack.c.b16 %v617, %v616
        %v637 = vpack.c.b16 %v619, %v618
        %v638 = vpack.c.b16 %v621, %v620
        %v639 = vpack.c.b16 %v623, %v622
        %v640 = vpack.c.b16 %v625, %v624
        %v641 = vpack.c.b16 %v627, %v626
        %v642 = vpack.c.b16 %v629, %v628
        %v643 = vpack.c.b16 %v631, %v630
        %vm656 = vcmask 523264
        %v658 = vsel %vm656, %v582, 0
        %660 = vmatprep.subr.bf16.mxu0 0
        %661 = vmatpush1.bf16.msra.mxu0 %v632
        %662 = vmatprep.subr.bf16.mxu0 0
        %663 = vmatpush1.bf16.msra.mxu0 %v633
        %664 = vmatprep.subr.bf16.mxu0 0
        %665 = vmatpush1.bf16.msra.mxu0 %v634
        %666 = vmatprep.subr.bf16.mxu0 0
        %667 = vmatpush1.bf16.msra.mxu0 %v635
        %668 = vmatprep.subr.bf16.mxu0 0
        %669 = vmatpush1.bf16.msra.mxu0 %v636
        %670 = vmatprep.subr.bf16.mxu0 0
        %671 = vmatpush1.bf16.msra.mxu0 %v637
        %672 = vmatprep.subr.bf16.mxu0 0
        %673 = vmatpush1.bf16.msra.mxu0 %v638
        %674 = vmatprep.subr.bf16.mxu0 0
        %675 = vmatpush1.bf16.msra.mxu0 %v639
        %676 = vmatprep.subr.bf16.mxu0 0
        %677 = vmatpush1.bf16.msra.mxu0 %v640
        %678 = vmatprep.subr.bf16.mxu0 0
        %679 = vmatpush1.bf16.msra.mxu0 %v641
        %680 = vmatprep.subr.bf16.mxu0 0
        %681 = vmatpush1.bf16.msra.mxu0 %v642
        %682 = vmatprep.subr.bf16.mxu0 0
        %683 = vmatpush1.bf16.msra.mxu0 %v643
        %684 = vmatprep.subr.bf16.mxu0 0
        %685 = vmatpush1.bf16.msra.mxu0 0
        %686 = vmatprep.subr.bf16.mxu0 0
        %687 = vmatpush1.bf16.msra.mxu0 0
        %688 = vmatprep.subr.bf16.mxu0 0
        %689 = vmatpush1.bf16.msra.mxu0 0
        %690 = vmatprep.subr.bf16.mxu0 0
        %691 = vmatpush1.bf16.msra.mxu0 0
        %692 = vmatprep.mubr.bf16.mxu0 %v658
        %693 = vmatmul.mubr.bf16.gmra.mrb[0].mxu0 %v581
        %v694 = vpop.f32.mrb[0].mxu0
        %v695 = vadd.f32 %v577, %v694
        %v696 = vpop.f32.mrb[0].mxu0
        %v697 = vpop.f32.mrb[0].mxu0
        %v698 = vpop.f32.mrb[0].mxu0
        %699 = vdwg.mxu0
        %v700 = vld [vmem:[%s5] sm:$0x1]
        %v702 = vlaneseq
        %v703 = vshrl.u32 %v702, 7
        %v704 = vsub.s32 0, %v703
        %v705 = vrot.slane %v700, %v704
        %v707 = vadd.f32 %v695, %v705
        %vm708 = vcmask 392192
        %v709 = vsel %vm708, %v707, 0.0
        %710 = vadd.xlane.f32.xlu0 %v709
        %v711 = vpop.xlane.xlu0 %710
        %v712 = vrcp.pop 48.0
        %v713 = vmul.f32 %v711, %v712
        %v714 = vsub.f32 %v707, %v713
        %v715 = vmul.f32 %v714, %v714
        %v716 = vsel %vm708, %v715, 0.0
        %717 = vadd.xlane.f32.xlu0 %v716
        %v718 = vpop.xlane.xlu0 %717
        %v719 = vmul.f32 %v718, %v712
        %v720 = vadd.f32 %v719, 1e-05
        %v721 = vrsqrt.pop %v720
        %v722 = vmul.f32 %v714, %v721
        %v723 = vld [vmem:[%s6] sm:$0x1]
        %v725 = vlaneseq
        %v726 = vshrl.u32 %v725, 7
        %v727 = vsub.s32 0, %v726
        %v728 = vrot.slane %v723, %v727
        %v730 = vmul.f32 %v722, %v728
        %v731 = vld [vmem:[%s7] sm:$0x1]
        %v733 = vlaneseq
        %v734 = vshrl.u32 %v733, 7
        %v735 = vsub.s32 0, %v734
        %v736 = vrot.slane %v731, %v735
        %v738 = vadd.f32 %v730, %v736
        %v739 = vmul.f32 %v738, %v738
        %v740 = vmul.f32 %v738, %v739
        %v741 = vmul.f32 %v740, 0.044715
        %v742 = vadd.f32 %v738, %v741
        %v743 = vmul.f32 %v742, 0.7978846
        %v744 = vtanh.pop %v743
        %v745 = vadd.f32 %v744, 1.0
        %v746 = vmul.f32 %v745, 0.5
        %v747 = vmul.f32 %v738, %v746
        %v748 = vpack.c.bf16 %v747, %v747
        %v749 = vld [vmem:[%s8] sm:$0xf]
        %v750 = vld [vmem:[%s8 + $0x4] sm:$0xf]
        %v751 = vld [vmem:[%s8 + $0x8] sm:$0xf]
        %v752 = vld [vmem:[%s8 + $0xc] sm:$0xf]
        %v753 = vld [vmem:[%s8 + $0x10] sm:$0xf]
        %v754 = vld [vmem:[%s8 + $0x14] sm:$0xf]
        %v755 = vld [vmem:[%s9] sm:$0x1]
        %v757 = vlaneseq
        %v758 = vshrl.u32 %v757, 7
        %v759 = vsub.s32 0, %v758
        %v760 = vrot.slane %v755, %v759
        %v768 = vunpack.c.l.b16 %v749
        %v769 = vunpack.c.l.b16 %v750
        %v770 = vunpack.c.l.b16 %v751
        %v771 = vunpack.c.l.b16 %v752
        %v772 = vunpack.c.l.b16 %v753
        %v773 = vunpack.c.l.b16 %v754
        %v774 = vpack.c.b16 %v769, %v768
        %v775 = vpack.c.b16 %v771, %v770
        %v776 = vpack.c.b16 %v773, %v772
        %v781 = vsel %vm708, %v748, 0
        %783 = vmatprep.subr.bf16.mxu0 0
        %784 = vmatpush1.bf16.msra.mxu0 %v774
        %785 = vmatprep.subr.bf16.mxu0 0
        %786 = vmatpush1.bf16.msra.mxu0 %v775
        %787 = vmatprep.subr.bf16.mxu0 0
        %788 = vmatpush1.bf16.msra.mxu0 %v776
        %789 = vmatprep.subr.bf16.mxu0 0
        %790 = vmatpush1.bf16.msra.mxu0 0
        %791 = vmatprep.subr.bf16.mxu0 0
        %792 = vmatpush1.bf16.msra.mxu0 0
        %793 = vmatprep.subr.bf16.mxu0 0
        %794 = vmatpush1.bf16.msra.mxu0 0
        %795 = vmatprep.subr.bf16.mxu0 0
        %796 = vmatpush1.bf16.msra.mxu0 0
        %797 = vmatprep.subr.bf16.mxu0 0
        %798 = vmatpush1.bf16.msra.mxu0 0
        %799 = vmatprep.subr.bf16.mxu0 0
        %800 = vmatpush1.bf16.msra.mxu0 0
        %801 = vmatprep.subr.bf16.mxu0 0
        %802 = vmatpush1.bf16.msra.mxu0 0
        %803 = vmatprep.subr.bf16.mxu0 0
        %804 = vmatpush1.bf16.msra.mxu0 0
        %805 = vmatprep.subr.bf16.mxu0 0
        %806 = vmatpush1.bf16.msra.mxu0 0
        %807 = vmatprep.subr.bf16.mxu0 0
        %808 = vmatpush1.bf16.msra.mxu0 0
        %809 = vmatprep.subr.bf16.mxu0 0
        %810 = vmatpush1.bf16.msra.mxu0 0
        %811 = vmatprep.subr.bf16.mxu0 0
        %812 = vmatpush1.bf16.msra.mxu0 0
        %813 = vmatprep.subr.bf16.mxu0 0
        %814 = vmatpush1.bf16.msra.mxu0 0
        %815 = vmatprep.mubr.bf16.mxu0 0
        %816 = vmatmul.mubr.bf16.gmra.mrb[0].mxu0 %v781
        %v817 = vpop.f32.mrb[0].mxu0
        %v818 = vadd.f32 %v760, %v817
        %v819 = vpop.f32.mrb[0].mxu0
        %v820 = vpop.f32.mrb[0].mxu0
        %v821 = vpop.f32.mrb[0].mxu0
        %822 = vdwg.mxu0
        %v823 = vpack.c.bf16 %v818, %v818
        %v824 = vld [vmem:[%s10] sm:$0xf]
        %v825 = vld [vmem:[%s10 + $0x4] sm:$0xf]
        %v826 = vld [vmem:[%s10 + $0x8] sm:$0xf]
        %v827 = vld [vmem:[%s10 + $0xc] sm:$0xf]
        %v828 = vld [vmem:[%s11] sm:$0x1]
        %v830 = vlaneseq
        %v831 = vshrl.u32 %v830, 7
        %v832 = vsub.s32 0, %v831
        %v833 = vrot.slane %v828, %v832
        %v839 = vunpack.c.l.b16 %v824
        %v840 = vunpack.c.l.b16 %v825
        %v841 = vunpack.c.l.b16 %v826
        %v842 = vunpack.c.l.b16 %v827
        %v843 = vpack.c.b16 %v840, %v839
        %v844 = vpack.c.b16 %v842, %v841
        %vm847 = vcmask 261120
        %v849 = vsel %vm847, %v823, 0
        %851 = vmatprep.subr.bf16.mxu0 0
        %852 = vmatpush1.bf16.msra.mxu0 %v843
        %853 = vmatprep.subr.bf16.mxu0 0
        %854 = vmatpush1.bf16.msra.mxu0 %v844
        %855 = vmatprep.subr.bf16.mxu0 0
        %856 = vmatpush1.bf16.msra.mxu0 0
        %857 = vmatprep.subr.bf16.mxu0 0
        %858 = vmatpush1.bf16.msra.mxu0 0
        %859 = vmatprep.subr.bf16.mxu0 0
        %860 = vmatpush1.bf16.msra.mxu0 0
        %861 = vmatprep.subr.bf16.mxu0 0
        %862 = vmatpush1.bf16.msra.mxu0 0
        %863 = vmatprep.subr.bf16.mxu0 0
        %864 = vmatpush1.bf16.msra.mxu0 0
        %865 = vmatprep.subr.bf16.mxu0 0
        %866 = vmatpush1.bf16.msra.mxu0 0
        %867 = vmatprep.subr.bf16.mxu0 0
        %868 = vmatpush1.bf16.msra.mxu0 0
        %869 = vmatprep.subr.bf16.mxu0 0
        %870 = vmatpush1.bf16.msra.mxu0 0
        %871 = vmatprep.subr.bf16.mxu0 0
        %872 = vmatpush1.bf16.msra.mxu0 0
        %873 = vmatprep.subr.bf16.mxu0 0
        %874 = vmatpush1.bf16.msra.mxu0 0
        %875 = vmatprep.subr.bf16.mxu0 0
        %876 = vmatpush1.bf16.msra.mxu0 0
        %877 = vmatprep.subr.bf16.mxu0 0
        %878 = vmatpush1.bf16.msra.mxu0 0
        %879 = vmatprep.subr.bf16.mxu0 0
        %880 = vmatpush1.bf16.msra.mxu0 0
        %881 = vmatprep.subr.bf16.mxu0 0
        %882 = vmatpush1.bf16.msra.mxu0 0
        %883 = vmatprep.mubr.bf16.mxu0 0
        %884 = vmatmul.mubr.bf16.gmra.mrb[0].mxu0 %v849
        %v885 = vpop.f32.mrb[0].mxu0
        %v886 = vadd.f32 %v833, %v885
        %v887 = vpop.f32.mrb[0].mxu0
        %v888 = vpop.f32.mrb[0].mxu0
        %v889 = vpop.f32.mrb[0].mxu0
        %890 = vdwg.mxu0
        %v891 = vmul.f32 %v886, %v886
        %v892 = vmul.f32 %v886, %v891
        %v893 = vmul.f32 %v892, 0.044715
        %v894 = vadd.f32 %v886, %v893
        %v895 = vmul.f32 %v894, 0.7978846
        %v896 = vtanh.pop %v895
        %v897 = vadd.f32 %v896, 1.0
        %v898 = vmul.f32 %v897, 0.5
        %v899 = vmul.f32 %v886, %v898
        %v900 = vpack.c.bf16 %v899, %v899
        %v901 = vld [vmem:[%s12] sm:$0xf]
        %v902 = vld [vmem:[%s12 + $0x4] sm:$0xf]
        %v903 = vld [vmem:[%s13] sm:$0x1]
        %v905 = vlaneseq
        %v906 = vshrl.u32 %v905, 7
        %v907 = vsub.s32 0, %v906
        %v908 = vrot.slane %v903, %v907
        %v912 = vunpack.c.l.b16 %v901
        %v913 = vunpack.c.l.b16 %v902
        %v914 = vpack.c.b16 %v913, %v912
        %vm916 = vcmask 130048
        %v918 = vsel %vm916, %v900, 0
        %920 = vmatprep.subr.bf16.mxu0 0
        %921 = vmatpush1.bf16.msra.mxu0 %v914
        %922 = vmatprep.subr.bf16.mxu0 0
        %923 = vmatpush1.bf16.msra.mxu0 0
        %924 = vmatprep.subr.bf16.mxu0 0
        %925 = vmatpush1.bf16.msra.mxu0 0
        %926 = vmatprep.subr.bf16.mxu0 0
        %927 = vmatpush1.bf16.msra.mxu0 0
        %928 = vmatprep.subr.bf16.mxu0 0
        %929 = vmatpush1.bf16.msra.mxu0 0
        %930 = vmatprep.subr.bf16.mxu0 0
        %931 = vmatpush1.bf16.msra.mxu0 0
        %932 = vmatprep.subr.bf16.mxu0 0
        %933 = vmatpush1.bf16.msra.mxu0 0
        %934 = vmatprep.subr.bf16.mxu0 0
        %935 = vmatpush1.bf16.msra.mxu0 0
        %936 = vmatprep.subr.bf16.mxu0 0
        %937 = vmatpush1.bf16.msra.mxu0 0
        %938 = vmatprep.subr.bf16.mxu0 0
        %939 = vmatpush1.bf16.msra.mxu0 0
        %940 = vmatprep.subr.bf16.mxu0 0
        %941 = vmatpush1.bf16.msra.mxu0 0
        %942 = vmatprep.subr.bf16.mxu0 0
        %943 = vmatpush1.bf16.msra.mxu0 0
        %944 = vmatprep.subr.bf16.mxu0 0
        %945 = vmatpush1.bf16.msra.mxu0 0
        %946 = vmatprep.subr.bf16.mxu0 0
        %947 = vmatpush1.bf16.msra.mxu0 0
        %948 = vmatprep.subr.bf16.mxu0 0
        %949 = vmatpush1.bf16.msra.mxu0 0
        %950 = vmatprep.subr.bf16.mxu0 0
        %951 = vmatpush1.bf16.msra.mxu0 0
        %952 = vmatprep.mubr.bf16.mxu0 0
        %953 = vmatmul.mubr.bf16.gmra.mrb[0].mxu0 %v918
        %v954 = vpop.f32.mrb[0].mxu0
        %v955 = vadd.f32 %v908, %v954
        %v956 = vpop.f32.mrb[0].mxu0
        %v957 = vpop.f32.mrb[0].mxu0
        %v958 = vpop.f32.mrb[0].mxu0
        %959 = vdwg.mxu0
        %v960 = vstv %s538
        %v961 = vmul.f32 %v955, %v960
        %v962 = vadd.f32 %v818, %v961
        %v963 = vstv %s537
        %v964 = vmul.f32 %v962, %v963
        %v965 = vstv %s536
        %v966 = vrsqrt.pop %v965
        %v967 = vmul.f32 %v965, %v966
        %vm968 = vcmp.eq.f32.partialorder %v965, inf
        %v969 = vsel %vm968, %v965, %v967
        %vm970 = vcmp.eq.f32.partialorder %v965, 0.0
        %v971 = vand.u32 %v965, 2147483648
        %v972 = vsel %vm970, %v971, %v969
        %s973 = vtos %v972
        %v974 = vstv %s536
        %v975 = vrsqrt.pop %v974
        %s976 = vtos %v975
        %s977 = smul.f32 %s976, 0.99999
        %v978 = vmul.f32 %v964, %v964
        %v979 = vsel %vm847, %v978, 0.0
        %980 = vadd.xlane.f32.xlu0 %v979
        %v981 = vpop.xlane.xlu0 %980
        %v982 = vrsqrt.pop %v981
        %v983 = vmul.f32 %v981, %v982
        %vm984 = vcmp.eq.f32.partialorder %v981, inf
        %v985 = vsel %vm984, %v981, %v983
        %vm986 = vcmp.eq.f32.partialorder %v981, 0.0
        %v987 = vand.u32 %v981, 2147483648
        %v988 = vsel %vm986, %v987, %v985
        %v989 = vmax.f32 %v988, 1e-07
        %v990 = vstv %s973
        %v991 = vmul.f32 %v990, %v989
        %v992 = vtanh.pop %v991
        %v993 = vrcp.pop %v991
        %v994 = vmul.f32 %v992, %v993
        %v995 = vmul.f32 %v964, %v994
        %v996 = vstv %s976
        %v997 = vmul.f32 %v992, %v996
        %v998 = vmax.f32 %v997, 1e-07
        %v999 = vrcp.pop %v998
        %v1000 = vstv %s977
        %v1001 = vmul.f32 %v1000, %v999
        %v1002 = vmin.f32 %v1001, 1.0
        %v1003 = vmul.f32 %v995, %v1002
        %v1004 = vmin.f32 %v998, %v1000
        %v1005 = vmul.f32 %v990, %v1004
        %v1006 = vadd.f32 %v1005, 1.0
        %v1007 = vsub.f32 1.0, %v1005
        %v1008 = vrcp.pop %v1007
        %v1009 = vmul.f32 %v1006, %v1008
        %v1010 = vlog2.pop %v1009
        %v1011 = vmul.f32 %v1010, 0.6931472
        %v1012 = vmul.f32 %v1011, 0.5
        %v1013 = vrcp.pop %v1005
        %v1014 = vmul.f32 %v1012, %v1013
        %1015 = vst.msk [vmem:[%s518] sm:$0xff] %vm847, %v1003
        %s1016 = sadd.f32 %s537, 1e-07
        %v1017 = vstv %s1016
        %v1018 = vrcp.pop %v1017
        %v1019 = vmul.f32 %v1014, %v1018
        %v1020 = vmul.f32 %v1003, %v1019
        %1021 = vst.msk [vmem:[%s525] sm:$0xff] %vm847, %v1020
        %s1022 = sand.u32 %s346, 1
        %s1023 = scalar_lea.sflag [#allocation3], %s1022
        %s1024 = sand.u32 %s346, 1
        %s1025 = smul.addr %s1024, 8
        %s1026 = scalar_lea.vmem [#allocation5], %s1025
        %s1027 = sand.u32 %s372, 1
        %s1028 = scalar_lea.sflag [#allocation7], %s1027
        %s1029 = sand.u32 %s372, 1
        %s1030 = smul.addr %s1029, 8
        %s1031 = scalar_lea.vmem [#allocation6], %s1030
        // Predicated region
        $region81: #{wubu_level_forward.1} parent=75 // pred_check
          %p1032 = pneg %p356
        $region82: #{wubu_level_forward.1} parent=75 // pred_check_branch
          %1034 = sbr.rel (%p1032) target = $region84
        $region83: #{wubu_level_forward.1} parent=75 // pred_region
          %s1036 = ssub.s32 128, 128
          %1037 = vsyncadd %s1023, %s1036
          %s1038 = smul.addr %s34, 128
          %s1039 = scalar_lea.hbm %s14, %s1038
          %s1041 = sshll.u32 %s1026, 4
          %s1042 = int_to_ptr.vmem [resolvable:$true] %s1041
          %1044 = dma.vmem_to_hbm [thread:$0]  %s1042, 128, %s1039, %s1023
        $region84: #{wubu_level_forward.1} parent=75 // pred_fallthru
          _
        // Predicated region
        $region85: #{wubu_level_forward.1} parent=75 // pred_check
          %p1045 = pneg %p382
        $region86: #{wubu_level_forward.1} parent=75 // pred_check_branch
          %1047 = sbr.rel (%p1045) target = $region88
        $region87: #{wubu_level_forward.1} parent=75 // pred_region
          %s1049 = ssub.s32 128, 128
          %1050 = vsyncadd %s1028, %s1049
          %s1051 = smul.addr %s34, 128
          %s1052 = scalar_lea.hbm %s15, %s1051
          %s1054 = sshll.u32 %s1031, 4
          %s1055 = int_to_ptr.vmem [resolvable:$true] %s1054
          %1057 = dma.vmem_to_hbm [thread:$0]  %s1055, 128, %s1052, %s1028
        $region88: #{wubu_level_forward.1} parent=75 // pred_fallthru
          _
      $region76: #{wubu_level_forward.1} parent=5 // pred_fallthru
        _
      %p1058 = scmp.le.s32.totalorder 2, %s29
      // Predicated region
      $region89: #{wubu_level_forward.1} parent=5 // pred_check
        %p1059 = pneg %p1058
      $region90: #{wubu_level_forward.1} parent=5 // pred_check_branch
        %1061 = sbr.rel (%p1059) target = $region92
      $region91: #{wubu_level_forward.1} parent=5 // pred_region
        %s1062 = ssub.s32 %s29, 2
        // Predicated region
        $region93: #{wubu_level_forward.1} parent=91 // pred_check
          %p1063 = pneg %p362
        $region94: #{wubu_level_forward.1} parent=91 // pred_check_branch
          %1065 = sbr.rel (%p1063) target = $region96
        $region95: #{wubu_level_forward.1} parent=91 // pred_region
          %s1066 = sand.u32 %s347, 1
          %s1067 = scalar_lea.sflag [#allocation3], %s1066
          %s1068 = sand.u32 %s347, 1
          %s1069 = smul.addr %s1068, 8
          %s1070 = scalar_lea.vmem [#allocation5], %s1069
          %1071 = dma.done %s1067, 128
        $region96: #{wubu_level_forward.1} parent=91 // pred_fallthru
          _
        // Predicated region
        $region97: #{wubu_level_forward.1} parent=91 // pred_check
          %p1072 = pneg %p388
        $region98: #{wubu_level_forward.1} parent=91 // pred_check_branch
          %1074 = sbr.rel (%p1072) target = $region100
        $region99: #{wubu_level_forward.1} parent=91 // pred_region
          %s1075 = sand.u32 %s373, 1
          %s1076 = scalar_lea.sflag [#allocation7], %s1075
          %s1077 = sand.u32 %s373, 1
          %s1078 = smul.addr %s1077, 8
          %s1079 = scalar_lea.vmem [#allocation6], %s1078
          %1080 = dma.done %s1076, 128
        $region100: #{wubu_level_forward.1} parent=91 // pred_fallthru
          _
      $region92: #{wubu_level_forward.1} parent=5 // pred_fallthru
        _
    $region6: #{wubu_level_forward.1} parent=1 // loop_footer
      %s33 = sadd.s32 1, %s29
    $region7: #{wubu_level_forward.1} parent=1 // loop_footer_branch
      %28 = sbr.rel target = $region3
    $region8: #{wubu_level_forward.1} parent=1 // loop_exit
      _
    %1081 = vsyncpa [#allocation3], 1
    %s1082 = scalar_lea.sflag [#allocation3], 1
    %1083 = vsyncpa %s1082, 1
    %1084 = vsyncpa [#allocation7], 1
    %s1085 = scalar_lea.sflag [#allocation7], 1
    %1086 = vsyncpa %s1085, 1
    %1087 = vsyncpa [#allocation4], 1
    %s1088 = scalar_lea.sflag [#allocation4], 1
    %1089 = vsyncpa %s1088, 1

</llo_original>
